<compile_context>
chip_gen: v7x
topology: tpu7x:2x2x1
jax: 0.10.0
libtpu: 0.0.40
codegen_flags: <defaults>
</compile_context>

<pallas_src>
import functools

import jax
import jax.numpy as jnp
from jax.experimental import pallas as pl
from jax.experimental.pallas import tpu as pltpu


def _unet_up_kernel(x_ref, w_ref, o_ref, stats_ref, *cache, TH, H, W, eps, flatten):
    """One (sample, pass, row-tile) grid step.

    x_ref:     (1, H+2, W+2, Cin)  zero-padded NHWC input, bf16  (resident per sample)
    w_ref:     (4, 4*Cin, Cout)    fused per-phase weights, bf16 (resident)
    o_ref:     (1, 4, TH, W*Cout)  [flatten] or (1, 4, TH, W, Cout) out tile, bf16
    stats_ref: (2, Cout) f32       per-channel [sum, sum_sq] accumulator (VMEM scratch)
    cache:     optional (H//TH, 4, TH*W, Cout) f32 pre-norm conv cache (VMEM scratch)
    """
    cache_ref = cache[0] if cache else None
    p = pl.program_id(1)          # 0: conv + statistics pass, 1: normalize + store pass
    t = pl.program_id(2)          # output row tile
    cin = x_ref.shape[-1]
    cout = w_ref.shape[-1]

    r0 = t * TH
    if TH % 8 == 0:
        r0 = pl.multiple_of(r0, 8)   # aligned sublane loads for the shifted views

    def make_phase_fn():
        # 9 distinct shifted views of the padded input (deduplicated across the
        # 16 (phase, tap) pairs), hoisted once; channels stay on lanes.
        v = [[x_ref[0, pl.ds(r0 + i, TH), pl.ds(j, W), :].reshape(TH * W, cin)
              for j in range(3)] for i in range(3)]

        def phase(a, b):
            # ConvTranspose2d(k=4, s=2, p=1), sub-pixel phase (a, b):
            #   y[2m+a, 2n+b, :] = sum_{dh,dw} xp[m+a+dh, n+b+dw, :] @ W[a,b,dh,dw]
            # The 4 taps are fused into one K = 4*Cin MXU matmul (f32 accumulate).
            xcat = jnp.concatenate(
                [v[a][b], v[a][b + 1], v[a + 1][b], v[a + 1][b + 1]], axis=1)
            return jnp.dot(xcat, w_ref[2 * a + b],
                           preferred_element_type=jnp.float32)

        return phase

    @pl.when(jnp.logical_and(p == 0, t == 0))
    def _():
        stats_ref[...] = jnp.zeros_like(stats_ref)

    @pl.when(p == 0)
    def _():
        phase = make_phase_fn()
        ssum = jnp.zeros((1, cout), jnp.float32)
        ssq = jnp.zeros((1, cout), jnp.float32)
        for a in range(2):
            for b in range(2):
                acc = phase(a, b)
                if cache_ref is not None:          # cache pre-norm conv -> no recompute
                    cache_ref[t, 2 * a + b] = acc
                ssum = ssum + jnp.sum(acc, axis=0, keepdims=True)
                ssq = ssq + jnp.sum(acc * acc, axis=0, keepdims=True)
        stats_ref[...] += jnp.concatenate([ssum, ssq], axis=0)

    @pl.when(p == 1)
    def _():
        # Note: variance as E[y^2]-E[y]^2 in f32 (fine at the tested tolerance;
        # a centered second pass would give tighter torch parity).
        inv_n = 1.0 / (4.0 * H * W)                 # 2H * 2W output pixels / channel
        mean = stats_ref[0:1, :] * inv_n            # (1, Cout)
        var = jnp.maximum(stats_ref[1:2, :] * inv_n - mean * mean, 0.0)
        rstd = jax.lax.rsqrt(var + eps)
        phase = None if cache_ref is not None else make_phase_fn()
        for a in range(2):
            for b in range(2):
                ph = 2 * a + b
                acc = cache_ref[t, ph] if cache_ref is not None else phase(a, b)
                # InstanceNorm2d (affine=False, biased var, eps) + ReLU in f32,
                # then drain this phase immediately (low vreg pressure).
                yn = jnp.maximum((acc - mean) * rstd, 0.0).reshape(TH, W, cout)
                if flatten:
                    # Lane-dense (TH, W*Cout) slab -> unmasked vector stores.
                    slab = jnp.concatenate([yn[:, w_, :] for w_ in range(W)], axis=-1)
                    o_ref[0, ph] = slab.astype(o_ref.dtype)
                else:
                    o_ref[0, ph] = yn.astype(o_ref.dtype)


def _pick_tile_rows(H, W, Cin, Cout, requested):
    """Biggest row tile that fits a v7x-safe VMEM budget, preferring TH % 8 == 0."""
    if requested is not None:
        th = max(1, min(int(requested), H))
        while H % th:
            th -= 1
        return th
    budget = 12 << 20
    per_row = 4 * W * (12 * max(Cout, 128) + 2 * max(4 * Cin, 128))  # rough bytes/row
    cap = max(1, budget // max(per_row, 1))
    divs = [d for d in range(1, H + 1) if H % d == 0 and d <= cap]
    if not divs:
        return 1
    aligned = [d for d in divs if d % 8 == 0]
    # TODO(synk): for very deep decoder layers (tiny H*W, huge channels) fold
    # several batch samples into one grid step to grow the MXU M dimension.
    return max(aligned) if aligned else max(divs)


def unet_up_forward(x, skip, w, *, tile_rows=None, eps=1e-5, channels_last=False):
    """UNetUp.forward (dropout=0.0).

    x:    (N, Cin, H, W)     NCHW
    skip: (N, Cs, 2H, 2W)    NCHW
    w:    (Cin, Cout, 4, 4)  torch ConvTranspose2d weight layout
    """
    N, Cin, H, W = x.shape
    wCin, Cout, KH, KW = w.shape
    assert wCin == Cin and KH == 4 and KW == 4
    assert skip.shape[0] == N and skip.shape[2] == 2 * H and skip.shape[3] == 2 * W

    TH = _pick_tile_rows(H, W, Cin, Cout, tile_rows)
    HT = H // TH
    # Lane-dense output slab only when Cout alone would leave stores lane-sparse
    # and the row tile keeps the flattened block sublane-aligned.
    flatten = (Cout < 128) and (W <= 32) and (TH % 8 == 0 or TH == H)

    # Entry layout conversion (once): NCHW -> padded NHWC, bf16 into the MXU.
    x_nhwc = jnp.transpose(x, (0, 2, 3, 1))
    xp = jnp.pad(x_nhwc, ((0, 0), (1, 1), (1, 1), (0, 0))).astype(jnp.bfloat16)

    # Fused per-phase weights (4, 4*Cin, Cout): K-block (dh, dw) of phase (a, b)
    # is w[:, :, 3-a-2*dh, 3-b-2*dw]  (kernel flip + stride-2 phase selection).
    phases = []
    for a in range(2):
        for b in range(2):
            taps = [w[:, :, 3 - a - 2 * dh, 3 - b - 2 * dw]
                    for dh in range(2) for dw in range(2)]
            phases.append(jnp.concatenate(taps, axis=0))            # (4*Cin, Cout)
    w4 = jnp.stack(phases, axis=0).astype(jnp.bfloat16)             # (4, 4*Cin, Cout)

    # Cache pre-norm conv phases in VMEM so pass 1 runs no matmuls; gate on a
    # budget that is safe on v7x's 64 MiB physical VMEM (lane padding included).
    lane_cout = max(Cout, 128)
    cache_bytes = 4 * H * W * lane_cout * 4
    use_cache = cache_bytes <= (8 << 20)
    scratch = [pltpu.VMEM((2, Cout), jnp.float32)]
    if use_cache:
        scratch.append(pltpu.VMEM((HT, 4, TH * W, Cout), jnp.float32))

    if flatten:
        out_dims, blk = (N, 4, H, W * Cout), (1, 4, TH, W * Cout)
        out_map = lambda n, p, t: (n, 0, p * t, 0)
    else:
        out_dims, blk = (N, 4, H, W, Cout), (1, 4, TH, W, Cout)
        out_map = lambda n, p, t: (n, 0, p * t, 0, 0)

    est = (2 * (H + 2) * (W + 2) * max(Cin, 128) * 2       # padded input, 2 buffers
           + 2 * 16 * Cin * lane_cout * 2                  # fused weights, 2 buffers
           + 2 * 4 * TH * W * lane_cout * 2                # bf16 output blocks
           + (cache_bytes if use_cache else 0)
           + 48 * TH * W * max(4 * Cin, 128))               # live f32 working set slack
    vmem_limit = int(min(max(2 * est, 32 << 20), 48 << 20))

    kern = functools.partial(_unet_up_kernel, TH=TH, H=H, W=W, eps=eps, flatten=flatten)
    out_ps = pl.pallas_call(
        kern,
        out_shape=jax.ShapeDtypeStruct(out_dims, jnp.bfloat16),
        grid=(N, 2, HT),
        in_specs=[
            # Constant block index across (p, t): padded input is DMA'd once per
            # sample, weights once per call.  (pl.Buffered(1) on these would drop
            # the unused second pipeline buffer for very large weights on v7x.)
            pl.BlockSpec((1, H + 2, W + 2, Cin), lambda n, p, t: (n, 0, 0, 0)),
            pl.BlockSpec((4, 4 * Cin, Cout), lambda n, p, t: (0, 0, 0)),
        ],
        # Pass 0 keeps the output block index constant (never flushes the
        # not-yet-written block); pass 1 walks the row tiles, writing each once.
        out_specs=pl.BlockSpec(blk, out_map),
        scratch_shapes=scratch,
        compiler_params=pltpu.CompilerParams(
            # Only the batch axis is parallel (keep batch >= 2/chip so both v7x
            # TensorCores are busy); pass/tile axes carry scratch state.
            dimension_semantics=("parallel", "arbitrary", "arbitrary"),
            vmem_limit_bytes=vmem_limit),
    )(xp, w4)

    # Exit: phase-separated channels-last -> requested layout, in bf16.
    #   out_ps[n, 2a+b, m, w*Cout + c] == y[n, 2m+a, 2w+b, c]
    y = out_ps.reshape(N, 2, 2, H, W, Cout)                  # (n, a, b, m, w, c)
    if channels_last:
        y = jnp.transpose(y, (0, 3, 1, 4, 2, 5)).reshape(N, 2 * H, 2 * W, Cout)
        s = jnp.transpose(skip, (0, 2, 3, 1)).astype(y.dtype)
        return jnp.concatenate([y, s], axis=-1)
    y = jnp.transpose(y, (0, 5, 3, 1, 4, 2)).reshape(N, Cout, 2 * H, 2 * W)
    # TODO(synk): nn.Dropout branch omitted (module default dropout=0.0; identity).
    return jnp.concatenate([y, skip.astype(y.dtype)], axis=1)


def _reference_forward(x, skip, w, eps=1e-5):
    """Pure-JAX reference of the PyTorch UNetUp forward (NCHW, f32)."""
    w_flip = jnp.transpose(w, (1, 0, 2, 3))[:, :, ::-1, ::-1]    # (Cout, Cin, 4, 4)
    y = jax.lax.conv_general_dilated(
        x, w_flip, window_strides=(1, 1), padding=((2, 2), (2, 2)),
        lhs_dilation=(2, 2), dimension_numbers=("NCHW", "OIHW", "NCHW"),
        precision=jax.lax.Precision.HIGHEST)
    mean = jnp.mean(y, axis=(2, 3), keepdims=True)
    var = jnp.mean((y - mean) ** 2, axis=(2, 3), keepdims=True)
    y = jnp.maximum((y - mean) * jax.lax.rsqrt(var + eps), 0.0)
    return jnp.concatenate([y, skip], axis=1)


if __name__ == "__main__":
    key = jax.random.PRNGKey(0)
    kx, ks, kw = jax.random.split(key, 3)

    # UNetUp(in_size=32, out_size=16): x (2,32,8,8), skip (2,16,16,16) -> (2,32,16,16)
    N, Cin, H, W = 2, 32, 8, 8
    Cout, Cskip = 16, 16
    x = jax.random.normal(kx, (N, Cin, H, W), jnp.float32)
    skip = jax.random.normal(ks, (N, Cskip, 2 * H, 2 * W), jnp.float32)
    bound = 1.0 / float(jnp.sqrt(Cin * 4 * 4))
    w = jax.random.uniform(kw, (Cin, Cout, 4, 4), jnp.float32, -bound, bound)

    ref = jax.block_until_ready(_reference_forward(x, skip, w))

    # Default tiling: lane-dense (flattened) stores + cached single-compute passes.
    out = jax.block_until_ready(unet_up_forward(x, skip, w))
    assert out.shape == ref.shape == (N, Cout + Cskip, 2 * H, 2 * W), (out.shape, ref.shape)
    out_f32 = out.astype(jnp.float32)
    assert bool(jnp.all(jnp.isfinite(out_f32)))
    assert bool(jnp.allclose(out_f32, ref, rtol=5e-2, atol=5e-2)), \
        float(jnp.max(jnp.abs(out_f32 - ref)))

    # Multi-row-tile path (TH=4 -> 2 tiles per pass, unflattened store branch).
    out2 = jax.block_until_ready(unet_up_forward(x, skip, w, tile_rows=4)).astype(jnp.float32)
    assert bool(jnp.allclose(out2, ref, rtol=5e-2, atol=5e-2)), \
        float(jnp.max(jnp.abs(out2 - ref)))

    # Channels-last exit (skips the NCHW relayout for NHWC consumers).
    out3 = jax.block_until_ready(
        unet_up_forward(x, skip, w, channels_last=True)).astype(jnp.float32)
    ref_nhwc = jnp.transpose(ref, (0, 2, 3, 1))
    assert bool(jnp.allclose(out3, ref_nhwc, rtol=5e-2, atol=5e-2)), \
        float(jnp.max(jnp.abs(out3 - ref_nhwc)))

    print("KERNEL_OK")
</pallas_src>

<mosaic_0001>
module attributes {stable_mosaic.version = 11 : i64} {
  func.func @_unet_up_kernel(%arg0: i32, %arg1: i32, %arg2: i32, %arg3: memref<1x10x10x32xbf16, #tpu.memory_space<vmem>>, %arg4: memref<4x128x16xbf16, #tpu.memory_space<vmem>>, %arg5: memref<1x4x8x128xbf16, #tpu.memory_space<vmem>>, %arg6: memref<2x16xf32, #tpu.memory_space<vmem>>, %arg7: memref<1x4x64x16xf32, #tpu.memory_space<vmem>>) attributes {dimension_semantics = [#tpu.dimension_semantics<parallel>, #tpu.dimension_semantics<arbitrary>, #tpu.dimension_semantics<arbitrary>], iteration_bounds = array<i64: 2, 2, 1>, scalar_prefetch = 0 : i64, scratch_operands = 2 : i64, tpu.core_type = #tpu.core_type<tc>, window_params = [{transform_indices = @transform_0, window_bounds = array<i64: 1, 10, 10, 32>}, {pipeline_mode = #tpu.pipeline_mode<synchronous>, transform_indices = @transform_1, window_bounds = array<i64: 4, 128, 16>}, {transform_indices = @transform_2, window_bounds = array<i64: 1, 4, 8, 128>}]} {
    %c8_i32 = arith.constant 8 : i32
    %0 = arith.muli %arg2, %c8_i32 : i32
    %1 = tpu.assume_multiple %0, 8 : i32
    %c0_i32 = arith.constant 0 : i32
    %2 = arith.cmpi eq, %arg1, %c0_i32 : i32
    %c0_i32_0 = arith.constant 0 : i32
    %3 = arith.cmpi eq, %arg2, %c0_i32_0 : i32
    %4 = arith.andi %2, %3 : i1
    %5 = arith.extui %4 : i1 to i32
    %c0_i32_1 = arith.constant 0 : i32
    %6 = arith.cmpi ne, %5, %c0_i32_1 : i32
    scf.if %6 {
      %cst = arith.constant 0.000000e+00 : f32
      %13 = vector.broadcast %cst : f32 to vector<2x16xf32>
      %c0 = arith.constant 0 : index
      %c0_5 = arith.constant 0 : index
      %14 = vector.load %arg6[%c0, %c0_5] : memref<2x16xf32, #tpu.memory_space<vmem>>, vector<2x16xf32>
      tpu.vector_store %arg6[%c0, %c0_5], %13 {strides = array<i32>} : memref<2x16xf32, #tpu.memory_space<vmem>>, vector<2x16xf32>,
    } else {
    }
    %c0_i32_2 = arith.constant 0 : i32
    %7 = arith.cmpi eq, %arg1, %c0_i32_2 : i32
    %8 = arith.extui %7 : i1 to i32
    %c0_i32_3 = arith.constant 0 : i32
    %9 = arith.cmpi ne, %8, %c0_i32_3 : i32
    scf.if %9 {
      %c0_i32_5 = arith.constant 0 : i32
      %13 = arith.addi %1, %c0_i32_5 : i32
      %c0 = arith.constant 0 : index
      %14 = arith.index_cast %13 : i32 to index
      %c0_6 = arith.constant 0 : index
      %c0_7 = arith.constant 0 : index
      %15 = vector.load %arg3[%c0, %14, %c0_6, %c0_7] : memref<1x10x10x32xbf16, #tpu.memory_space<vmem>>, vector<1x8x8x32xbf16>
      %16 = vector.shape_cast %15 : vector<1x8x8x32xbf16> to vector<8x8x32xbf16>
      %17 = vector.shape_cast %16 : vector<8x8x32xbf16> to vector<64x32xbf16>
      %c0_i32_8 = arith.constant 0 : i32
      %18 = arith.addi %1, %c0_i32_8 : i32
      %c0_9 = arith.constant 0 : index
      %19 = arith.index_cast %18 : i32 to index
      %c1 = arith.constant 1 : index
      %c0_10 = arith.constant 0 : index
      %20 = vector.load %arg3[%c0_9, %19, %c1, %c0_10] : memref<1x10x10x32xbf16, #tpu.memory_space<vmem>>, vector<1x8x8x32xbf16>
      %21 = vector.shape_cast %20 : vector<1x8x8x32xbf16> to vector<8x8x32xbf16>
      %22 = vector.shape_cast %21 : vector<8x8x32xbf16> to vector<64x32xbf16>
      %c0_i32_11 = arith.constant 0 : i32
      %23 = arith.addi %1, %c0_i32_11 : i32
      %c0_12 = arith.constant 0 : index
      %24 = arith.index_cast %23 : i32 to index
      %c2 = arith.constant 2 : index
      %c0_13 = arith.constant 0 : index
      %25 = vector.load %arg3[%c0_12, %24, %c2, %c0_13] : memref<1x10x10x32xbf16, #tpu.memory_space<vmem>>, vector<1x8x8x32xbf16>
      %26 = vector.shape_cast %25 : vector<1x8x8x32xbf16> to vector<8x8x32xbf16>
      %27 = vector.shape_cast %26 : vector<8x8x32xbf16> to vector<64x32xbf16>
      %c1_i32_14 = arith.constant 1 : i32
      %28 = arith.addi %1, %c1_i32_14 : i32
      %c0_15 = arith.constant 0 : index
      %29 = arith.index_cast %28 : i32 to index
      %c0_16 = arith.constant 0 : index
      %c0_17 = arith.constant 0 : index
      %30 = vector.load %arg3[%c0_15, %29, %c0_16, %c0_17] : memref<1x10x10x32xbf16, #tpu.memory_space<vmem>>, vector<1x8x8x32xbf16>
      %31 = vector.shape_cast %30 : vector<1x8x8x32xbf16> to vector<8x8x32xbf16>
      %32 = vector.shape_cast %31 : vector<8x8x32xbf16> to vector<64x32xbf16>
      %c1_i32_18 = arith.constant 1 : i32
      %33 = arith.addi %1, %c1_i32_18 : i32
      %c0_19 = arith.constant 0 : index
      %34 = arith.index_cast %33 : i32 to index
      %c1_20 = arith.constant 1 : index
      %c0_21 = arith.constant 0 : index
      %35 = vector.load %arg3[%c0_19, %34, %c1_20, %c0_21] : memref<1x10x10x32xbf16, #tpu.memory_space<vmem>>, vector<1x8x8x32xbf16>
      %36 = vector.shape_cast %35 : vector<1x8x8x32xbf16> to vector<8x8x32xbf16>
      %37 = vector.shape_cast %36 : vector<8x8x32xbf16> to vector<64x32xbf16>
      %c1_i32_22 = arith.constant 1 : i32
      %38 = arith.addi %1, %c1_i32_22 : i32
      %c0_23 = arith.constant 0 : index
      %39 = arith.index_cast %38 : i32 to index
      %c2_24 = arith.constant 2 : index
      %c0_25 = arith.constant 0 : index
      %40 = vector.load %arg3[%c0_23, %39, %c2_24, %c0_25] : memref<1x10x10x32xbf16, #tpu.memory_space<vmem>>, vector<1x8x8x32xbf16>
      %41 = vector.shape_cast %40 : vector<1x8x8x32xbf16> to vector<8x8x32xbf16>
      %42 = vector.shape_cast %41 : vector<8x8x32xbf16> to vector<64x32xbf16>
      %c2_i32 = arith.constant 2 : i32
      %43 = arith.addi %1, %c2_i32 : i32
      %c0_26 = arith.constant 0 : index
      %44 = arith.index_cast %43 : i32 to index
      %c0_27 = arith.constant 0 : index
      %c0_28 = arith.constant 0 : index
      %45 = vector.load %arg3[%c0_26, %44, %c0_27, %c0_28] : memref<1x10x10x32xbf16, #tpu.memory_space<vmem>>, vector<1x8x8x32xbf16>
      %46 = vector.shape_cast %45 : vector<1x8x8x32xbf16> to vector<8x8x32xbf16>
      %47 = vector.shape_cast %46 : vector<8x8x32xbf16> to vector<64x32xbf16>
      %c2_i32_29 = arith.constant 2 : i32
      %48 = arith.addi %1, %c2_i32_29 : i32
      %c0_30 = arith.constant 0 : index
      %49 = arith.index_cast %48 : i32 to index
      %c1_31 = arith.constant 1 : index
      %c0_32 = arith.constant 0 : index
      %50 = vector.load %arg3[%c0_30, %49, %c1_31, %c0_32] : memref<1x10x10x32xbf16, #tpu.memory_space<vmem>>, vector<1x8x8x32xbf16>
      %51 = vector.shape_cast %50 : vector<1x8x8x32xbf16> to vector<8x8x32xbf16>
      %52 = vector.shape_cast %51 : vector<8x8x32xbf16> to vector<64x32xbf16>
      %c2_i32_33 = arith.constant 2 : i32
      %53 = arith.addi %1, %c2_i32_33 : i32
      %c0_34 = arith.constant 0 : index
      %54 = arith.index_cast %53 : i32 to index
      %c2_35 = arith.constant 2 : index
      %c0_36 = arith.constant 0 : index
      %55 = vector.load %arg3[%c0_34, %54, %c2_35, %c0_36] : memref<1x10x10x32xbf16, #tpu.memory_space<vmem>>, vector<1x8x8x32xbf16>
      %56 = vector.shape_cast %55 : vector<1x8x8x32xbf16> to vector<8x8x32xbf16>
      %57 = vector.shape_cast %56 : vector<8x8x32xbf16> to vector<64x32xbf16>
      %cst = arith.constant 0.000000e+00 : f32
      %58 = vector.broadcast %cst : f32 to vector<1x16xf32>
      %cst_37 = arith.constant 0.000000e+00 : f32
      %59 = vector.broadcast %cst_37 : f32 to vector<1x16xf32>
      %60 = tpu.concatenate %17, %22, %32, %37 in 1 : vector<64x32xbf16>, vector<64x32xbf16>, vector<64x32xbf16>, vector<64x32xbf16> -> vector<64x128xbf16>
      %c0_38 = arith.constant 0 : index
      %c0_39 = arith.constant 0 : index
      %c0_40 = arith.constant 0 : index
      %61 = vector.load %arg4[%c0_38, %c0_39, %c0_40] : memref<4x128x16xbf16, #tpu.memory_space<vmem>>, vector<1x128x16xbf16>
      %62 = vector.shape_cast %61 : vector<1x128x16xbf16> to vector<128x16xbf16>
      %cst_41 = arith.constant dense<0.000000e+00> : vector<64x16xf32>
      %63 = tpu.matmul %60, %62, %cst_41 {dimension_numbers = #tpu.dot_dimension_numbers<[1], [0], [0], [1], [0, 0, 1, 1], [], []>} : vector<64x128xbf16>, vector<128x16xbf16>, vector<64x16xf32> -> vector<64x16xf32>
      %64 = arith.index_cast %arg2 : i32 to index
      %c0_42 = arith.constant 0 : index
      %c0_43 = arith.constant 0 : index
      %c0_44 = arith.constant 0 : index
      %65 = vector.load %arg7[%64, %c0_42, %c0_43, %c0_44] : memref<1x4x64x16xf32, #tpu.memory_space<vmem>>, vector<1x1x64x16xf32>
      %66 = vector.shape_cast %65 : vector<1x1x64x16xf32> to vector<64x16xf32>
      %67 = vector.shape_cast %63 : vector<64x16xf32> to vector<1x1x64x16xf32>
      tpu.vector_store %arg7[%64, %c0_42, %c0_43, %c0_44], %67 {strides = array<i32>} : memref<1x4x64x16xf32, #tpu.memory_space<vmem>>, vector<1x1x64x16xf32>,
      %cst_45 = arith.constant dense<0.000000e+00> : vector<16xf32>
      %68 = vector.multi_reduction <add>, %63, %cst_45 [0] : vector<64x16xf32> to vector<16xf32>
      %69 = vector.shape_cast %68 : vector<16xf32> to vector<1x16xf32>
      %70 = arith.addf %58, %69 : vector<1x16xf32>
      %71 = arith.mulf %63, %63 : vector<64x16xf32>
      %cst_46 = arith.constant dense<0.000000e+00> : vector<16xf32>
      %72 = vector.multi_reduction <add>, %71, %cst_46 [0] : vector<64x16xf32> to vector<16xf32>
      %73 = vector.shape_cast %72 : vector<16xf32> to vector<1x16xf32>
      %74 = arith.addf %59, %73 : vector<1x16xf32>
      %75 = tpu.concatenate %22, %27, %37, %42 in 1 : vector<64x32xbf16>, vector<64x32xbf16>, vector<64x32xbf16>, vector<64x32xbf16> -> vector<64x128xbf16>
      %c1_47 = arith.constant 1 : index
      %c0_48 = arith.constant 0 : index
      %c0_49 = arith.constant 0 : index
      %76 = vector.load %arg4[%c1_47, %c0_48, %c0_49] : memref<4x128x16xbf16, #tpu.memory_space<vmem>>, vector<1x128x16xbf16>
      %77 = vector.shape_cast %76 : vector<1x128x16xbf16> to vector<128x16xbf16>
      %cst_50 = arith.constant dense<0.000000e+00> : vector<64x16xf32>
      %78 = tpu.matmul %75, %77, %cst_50 {dimension_numbers = #tpu.dot_dimension_numbers<[1], [0], [0], [1], [0, 0, 1, 1], [], []>} : vector<64x128xbf16>, vector<128x16xbf16>, vector<64x16xf32> -> vector<64x16xf32>
      %79 = arith.index_cast %arg2 : i32 to index
      %c1_51 = arith.constant 1 : index
      %c0_52 = arith.constant 0 : index
      %c0_53 = arith.constant 0 : index
      %80 = vector.load %arg7[%79, %c1_51, %c0_52, %c0_53] : memref<1x4x64x16xf32, #tpu.memory_space<vmem>>, vector<1x1x64x16xf32>
      %81 = vector.shape_cast %80 : vector<1x1x64x16xf32> to vector<64x16xf32>
      %82 = vector.shape_cast %78 : vector<64x16xf32> to vector<1x1x64x16xf32>
      tpu.vector_store %arg7[%79, %c1_51, %c0_52, %c0_53], %82 {strides = array<i32>} : memref<1x4x64x16xf32, #tpu.memory_space<vmem>>, vector<1x1x64x16xf32>,
      %cst_54 = arith.constant dense<0.000000e+00> : vector<16xf32>
      %83 = vector.multi_reduction <add>, %78, %cst_54 [0] : vector<64x16xf32> to vector<16xf32>
      %84 = vector.shape_cast %83 : vector<16xf32> to vector<1x16xf32>
      %85 = arith.addf %70, %84 : vector<1x16xf32>
      %86 = arith.mulf %78, %78 : vector<64x16xf32>
      %cst_55 = arith.constant dense<0.000000e+00> : vector<16xf32>
      %87 = vector.multi_reduction <add>, %86, %cst_55 [0] : vector<64x16xf32> to vector<16xf32>
      %88 = vector.shape_cast %87 : vector<16xf32> to vector<1x16xf32>
      %89 = arith.addf %74, %88 : vector<1x16xf32>
      %90 = tpu.concatenate %32, %37, %47, %52 in 1 : vector<64x32xbf16>, vector<64x32xbf16>, vector<64x32xbf16>, vector<64x32xbf16> -> vector<64x128xbf16>
      %c2_56 = arith.constant 2 : index
      %c0_57 = arith.constant 0 : index
      %c0_58 = arith.constant 0 : index
      %91 = vector.load %arg4[%c2_56, %c0_57, %c0_58] : memref<4x128x16xbf16, #tpu.memory_space<vmem>>, vector<1x128x16xbf16>
      %92 = vector.shape_cast %91 : vector<1x128x16xbf16> to vector<128x16xbf16>
      %cst_59 = arith.constant dense<0.000000e+00> : vector<64x16xf32>
      %93 = tpu.matmul %90, %92, %cst_59 {dimension_numbers = #tpu.dot_dimension_numbers<[1], [0], [0], [1], [0, 0, 1, 1], [], []>} : vector<64x128xbf16>, vector<128x16xbf16>, vector<64x16xf32> -> vector<64x16xf32>
      %94 = arith.index_cast %arg2 : i32 to index
      %c2_60 = arith.constant 2 : index
      %c0_61 = arith.constant 0 : index
      %c0_62 = arith.constant 0 : index
      %95 = vector.load %arg7[%94, %c2_60, %c0_61, %c0_62] : memref<1x4x64x16xf32, #tpu.memory_space<vmem>>, vector<1x1x64x16xf32>
      %96 = vector.shape_cast %95 : vector<1x1x64x16xf32> to vector<64x16xf32>
      %97 = vector.shape_cast %93 : vector<64x16xf32> to vector<1x1x64x16xf32>
      tpu.vector_store %arg7[%94, %c2_60, %c0_61, %c0_62], %97 {strides = array<i32>} : memref<1x4x64x16xf32, #tpu.memory_space<vmem>>, vector<1x1x64x16xf32>,
      %cst_63 = arith.constant dense<0.000000e+00> : vector<16xf32>
      %98 = vector.multi_reduction <add>, %93, %cst_63 [0] : vector<64x16xf32> to vector<16xf32>
      %99 = vector.shape_cast %98 : vector<16xf32> to vector<1x16xf32>
      %100 = arith.addf %85, %99 : vector<1x16xf32>
      %101 = arith.mulf %93, %93 : vector<64x16xf32>
      %cst_64 = arith.constant dense<0.000000e+00> : vector<16xf32>
      %102 = vector.multi_reduction <add>, %101, %cst_64 [0] : vector<64x16xf32> to vector<16xf32>
      %103 = vector.shape_cast %102 : vector<16xf32> to vector<1x16xf32>
      %104 = arith.addf %89, %103 : vector<1x16xf32>
      %105 = tpu.concatenate %37, %42, %52, %57 in 1 : vector<64x32xbf16>, vector<64x32xbf16>, vector<64x32xbf16>, vector<64x32xbf16> -> vector<64x128xbf16>
      %c3 = arith.constant 3 : index
      %c0_65 = arith.constant 0 : index
      %c0_66 = arith.constant 0 : index
      %106 = vector.load %arg4[%c3, %c0_65, %c0_66] : memref<4x128x16xbf16, #tpu.memory_space<vmem>>, vector<1x128x16xbf16>
      %107 = vector.shape_cast %106 : vector<1x128x16xbf16> to vector<128x16xbf16>
      %cst_67 = arith.constant dense<0.000000e+00> : vector<64x16xf32>
      %108 = tpu.matmul %105, %107, %cst_67 {dimension_numbers = #tpu.dot_dimension_numbers<[1], [0], [0], [1], [0, 0, 1, 1], [], []>} : vector<64x128xbf16>, vector<128x16xbf16>, vector<64x16xf32> -> vector<64x16xf32>
      %109 = arith.index_cast %arg2 : i32 to index
      %c3_68 = arith.constant 3 : index
      %c0_69 = arith.constant 0 : index
      %c0_70 = arith.constant 0 : index
      %110 = vector.load %arg7[%109, %c3_68, %c0_69, %c0_70] : memref<1x4x64x16xf32, #tpu.memory_space<vmem>>, vector<1x1x64x16xf32>
      %111 = vector.shape_cast %110 : vector<1x1x64x16xf32> to vector<64x16xf32>
      %112 = vector.shape_cast %108 : vector<64x16xf32> to vector<1x1x64x16xf32>
      tpu.vector_store %arg7[%109, %c3_68, %c0_69, %c0_70], %112 {strides = array<i32>} : memref<1x4x64x16xf32, #tpu.memory_space<vmem>>, vector<1x1x64x16xf32>,
      %cst_71 = arith.constant dense<0.000000e+00> : vector<16xf32>
      %113 = vector.multi_reduction <add>, %108, %cst_71 [0] : vector<64x16xf32> to vector<16xf32>
      %114 = vector.shape_cast %113 : vector<16xf32> to vector<1x16xf32>
      %115 = arith.addf %100, %114 : vector<1x16xf32>
      %116 = arith.mulf %108, %108 : vector<64x16xf32>
      %cst_72 = arith.constant dense<0.000000e+00> : vector<16xf32>
      %117 = vector.multi_reduction <add>, %116, %cst_72 [0] : vector<64x16xf32> to vector<16xf32>
      %118 = vector.shape_cast %117 : vector<16xf32> to vector<1x16xf32>
      %119 = arith.addf %104, %118 : vector<1x16xf32>
      %c0_73 = arith.constant 0 : index
      %c0_74 = arith.constant 0 : index
      %120 = vector.load %arg6[%c0_73, %c0_74] : memref<2x16xf32, #tpu.memory_space<vmem>>, vector<2x16xf32>
      %121 = tpu.concatenate %115, %119 in 0 : vector<1x16xf32>, vector<1x16xf32> -> vector<2x16xf32>
      %122 = arith.addf %120, %121 : vector<2x16xf32>
      %c0_75 = arith.constant 0 : index
      %c0_76 = arith.constant 0 : index
      %123 = vector.load %arg6[%c0_75, %c0_76] : memref<2x16xf32, #tpu.memory_space<vmem>>, vector<2x16xf32>
      tpu.vector_store %arg6[%c0_75, %c0_76], %122 {strides = array<i32>} : memref<2x16xf32, #tpu.memory_space<vmem>>, vector<2x16xf32>,
    } else {
    }
    %c1_i32 = arith.constant 1 : i32
    %10 = arith.cmpi eq, %arg1, %c1_i32 : i32
    %11 = arith.extui %10 : i1 to i32
    %c0_i32_4 = arith.constant 0 : i32
    %12 = arith.cmpi ne, %11, %c0_i32_4 : i32
    scf.if %12 {
      %c0 = arith.constant 0 : index
      %c0_5 = arith.constant 0 : index
      %13 = vector.load %arg6[%c0, %c0_5] : memref<2x16xf32, #tpu.memory_space<vmem>>, vector<1x16xf32>
      %cst = arith.constant 3.906250e-03 : f32
      %14 = vector.broadcast %cst : f32 to vector<1x16xf32>
      %15 = arith.mulf %13, %14 : vector<1x16xf32>
      %c1 = arith.constant 1 : index
      %c0_6 = arith.constant 0 : index
      %16 = vector.load %arg6[%c1, %c0_6] : memref<2x16xf32, #tpu.memory_space<vmem>>, vector<1x16xf32>
      %cst_7 = arith.constant 3.906250e-03 : f32
      %17 = vector.broadcast %cst_7 : f32 to vector<1x16xf32>
      %18 = arith.mulf %16, %17 : vector<1x16xf32>
      %19 = arith.mulf %15, %15 : vector<1x16xf32>
      %20 = arith.subf %18, %19 : vector<1x16xf32>
      %cst_8 = arith.constant 0.000000e+00 : f32
      %21 = vector.broadcast %cst_8 : f32 to vector<1x16xf32>
      %22 = arith.maximumf %20, %21 : vector<1x16xf32>
      %cst_9 = arith.constant 9.99999974E-6 : f32
      %23 = vector.broadcast %cst_9 : f32 to vector<1x16xf32>
      %24 = arith.addf %22, %23 : vector<1x16xf32>
      %25 = math.rsqrt %24 : vector<1x16xf32>
      %26 = arith.index_cast %arg2 : i32 to index
      %c0_10 = arith.constant 0 : index
      %c0_11 = arith.constant 0 : index
      %c0_12 = arith.constant 0 : index
      %27 = vector.load %arg7[%26, %c0_10, %c0_11, %c0_12] : memref<1x4x64x16xf32, #tpu.memory_space<vmem>>, vector<1x1x64x16xf32>
      %28 = vector.shape_cast %27 : vector<1x1x64x16xf32> to vector<64x16xf32>
      %29 = vector.broadcast %15 : vector<1x16xf32> to vector<64x16xf32>
      %30 = arith.subf %28, %29 : vector<64x16xf32>
      %31 = vector.broadcast %25 : vector<1x16xf32> to vector<64x16xf32>
      %32 = arith.mulf %30, %31 : vector<64x16xf32>
      %cst_13 = arith.constant 0.000000e+00 : f32
      %33 = vector.broadcast %cst_13 : f32 to vector<64x16xf32>
      %34 = arith.maximumf %32, %33 : vector<64x16xf32>
      %35 = vector.shape_cast %34 : vector<64x16xf32> to vector<8x8x16xf32>
      %36 = vector.extract_strided_slice %35 {offsets = [0, 0, 0], sizes = [8, 1, 16], strides = [1, 1, 1]} : vector<8x8x16xf32> to vector<8x1x16xf32>
      %37 = vector.shape_cast %36 : vector<8x1x16xf32> to vector<8x16xf32>
      %38 = vector.extract_strided_slice %35 {offsets = [0, 1, 0], sizes = [8, 1, 16], strides = [1, 1, 1]} : vector<8x8x16xf32> to vector<8x1x16xf32>
      %39 = vector.shape_cast %38 : vector<8x1x16xf32> to vector<8x16xf32>
      %40 = vector.extract_strided_slice %35 {offsets = [0, 2, 0], sizes = [8, 1, 16], strides = [1, 1, 1]} : vector<8x8x16xf32> to vector<8x1x16xf32>
      %41 = vector.shape_cast %40 : vector<8x1x16xf32> to vector<8x16xf32>
      %42 = vector.extract_strided_slice %35 {offsets = [0, 3, 0], sizes = [8, 1, 16], strides = [1, 1, 1]} : vector<8x8x16xf32> to vector<8x1x16xf32>
      %43 = vector.shape_cast %42 : vector<8x1x16xf32> to vector<8x16xf32>
      %44 = vector.extract_strided_slice %35 {offsets = [0, 4, 0], sizes = [8, 1, 16], strides = [1, 1, 1]} : vector<8x8x16xf32> to vector<8x1x16xf32>
      %45 = vector.shape_cast %44 : vector<8x1x16xf32> to vector<8x16xf32>
      %46 = vector.extract_strided_slice %35 {offsets = [0, 5, 0], sizes = [8, 1, 16], strides = [1, 1, 1]} : vector<8x8x16xf32> to vector<8x1x16xf32>
      %47 = vector.shape_cast %46 : vector<8x1x16xf32> to vector<8x16xf32>
      %48 = vector.extract_strided_slice %35 {offsets = [0, 6, 0], sizes = [8, 1, 16], strides = [1, 1, 1]} : vector<8x8x16xf32> to vector<8x1x16xf32>
      %49 = vector.shape_cast %48 : vector<8x1x16xf32> to vector<8x16xf32>
      %50 = vector.extract_strided_slice %35 {offsets = [0, 7, 0], sizes = [8, 1, 16], strides = [1, 1, 1]} : vector<8x8x16xf32> to vector<8x1x16xf32>
      %51 = vector.shape_cast %50 : vector<8x1x16xf32> to vector<8x16xf32>
      %52 = tpu.concatenate %37, %39, %41, %43, %45, %47, %49, %51 in 1 : vector<8x16xf32>, vector<8x16xf32>, vector<8x16xf32>, vector<8x16xf32>, vector<8x16xf32>, vector<8x16xf32>, vector<8x16xf32>, vector<8x16xf32> -> vector<8x128xf32>
      %53 = arith.truncf %52 : vector<8x128xf32> to vector<8x128xbf16>
      %c0_14 = arith.constant 0 : index
      %c0_15 = arith.constant 0 : index
      %c0_16 = arith.constant 0 : index
      %c0_17 = arith.constant 0 : index
      %54 = vector.load %arg5[%c0_14, %c0_15, %c0_16, %c0_17] : memref<1x4x8x128xbf16, #tpu.memory_space<vmem>>, vector<1x1x8x128xbf16>
      %55 = vector.shape_cast %54 : vector<1x1x8x128xbf16> to vector<8x128xbf16>
      %56 = vector.shape_cast %53 : vector<8x128xbf16> to vector<1x1x8x128xbf16>
      tpu.vector_store %arg5[%c0_14, %c0_15, %c0_16, %c0_17], %56 {strides = array<i32>} : memref<1x4x8x128xbf16, #tpu.memory_space<vmem>>, vector<1x1x8x128xbf16>,
      %57 = arith.index_cast %arg2 : i32 to index
      %c1_18 = arith.constant 1 : index
      %c0_19 = arith.constant 0 : index
      %c0_20 = arith.constant 0 : index
      %58 = vector.load %arg7[%57, %c1_18, %c0_19, %c0_20] : memref<1x4x64x16xf32, #tpu.memory_space<vmem>>, vector<1x1x64x16xf32>
      %59 = vector.shape_cast %58 : vector<1x1x64x16xf32> to vector<64x16xf32>
      %60 = vector.broadcast %15 : vector<1x16xf32> to vector<64x16xf32>
      %61 = arith.subf %59, %60 : vector<64x16xf32>
      %62 = vector.broadcast %25 : vector<1x16xf32> to vector<64x16xf32>
      %63 = arith.mulf %61, %62 : vector<64x16xf32>
      %cst_21 = arith.constant 0.000000e+00 : f32
      %64 = vector.broadcast %cst_21 : f32 to vector<64x16xf32>
      %65 = arith.maximumf %63, %64 : vector<64x16xf32>
      %66 = vector.shape_cast %65 : vector<64x16xf32> to vector<8x8x16xf32>
      %67 = vector.extract_strided_slice %66 {offsets = [0, 0, 0], sizes = [8, 1, 16], strides = [1, 1, 1]} : vector<8x8x16xf32> to vector<8x1x16xf32>
      %68 = vector.shape_cast %67 : vector<8x1x16xf32> to vector<8x16xf32>
      %69 = vector.extract_strided_slice %66 {offsets = [0, 1, 0], sizes = [8, 1, 16], strides = [1, 1, 1]} : vector<8x8x16xf32> to vector<8x1x16xf32>
      %70 = vector.shape_cast %69 : vector<8x1x16xf32> to vector<8x16xf32>
      %71 = vector.extract_strided_slice %66 {offsets = [0, 2, 0], sizes = [8, 1, 16], strides = [1, 1, 1]} : vector<8x8x16xf32> to vector<8x1x16xf32>
      %72 = vector.shape_cast %71 : vector<8x1x16xf32> to vector<8x16xf32>
      %73 = vector.extract_strided_slice %66 {offsets = [0, 3, 0], sizes = [8, 1, 16], strides = [1, 1, 1]} : vector<8x8x16xf32> to vector<8x1x16xf32>
      %74 = vector.shape_cast %73 : vector<8x1x16xf32> to vector<8x16xf32>
      %75 = vector.extract_strided_slice %66 {offsets = [0, 4, 0], sizes = [8, 1, 16], strides = [1, 1, 1]} : vector<8x8x16xf32> to vector<8x1x16xf32>
      %76 = vector.shape_cast %75 : vector<8x1x16xf32> to vector<8x16xf32>
      %77 = vector.extract_strided_slice %66 {offsets = [0, 5, 0], sizes = [8, 1, 16], strides = [1, 1, 1]} : vector<8x8x16xf32> to vector<8x1x16xf32>
      %78 = vector.shape_cast %77 : vector<8x1x16xf32> to vector<8x16xf32>
      %79 = vector.extract_strided_slice %66 {offsets = [0, 6, 0], sizes = [8, 1, 16], strides = [1, 1, 1]} : vector<8x8x16xf32> to vector<8x1x16xf32>
      %80 = vector.shape_cast %79 : vector<8x1x16xf32> to vector<8x16xf32>
      %81 = vector.extract_strided_slice %66 {offsets = [0, 7, 0], sizes = [8, 1, 16], strides = [1, 1, 1]} : vector<8x8x16xf32> to vector<8x1x16xf32>
      %82 = vector.shape_cast %81 : vector<8x1x16xf32> to vector<8x16xf32>
      %83 = tpu.concatenate %68, %70, %72, %74, %76, %78, %80, %82 in 1 : vector<8x16xf32>, vector<8x16xf32>, vector<8x16xf32>, vector<8x16xf32>, vector<8x16xf32>, vector<8x16xf32>, vector<8x16xf32>, vector<8x16xf32> -> vector<8x128xf32>
      %84 = arith.truncf %83 : vector<8x128xf32> to vector<8x128xbf16>
      %c0_22 = arith.constant 0 : index
      %c1_23 = arith.constant 1 : index
      %c0_24 = arith.constant 0 : index
      %c0_25 = arith.constant 0 : index
      %85 = vector.load %arg5[%c0_22, %c1_23, %c0_24, %c0_25] : memref<1x4x8x128xbf16, #tpu.memory_space<vmem>>, vector<1x1x8x128xbf16>
      %86 = vector.shape_cast %85 : vector<1x1x8x128xbf16> to vector<8x128xbf16>
      %87 = vector.shape_cast %84 : vector<8x128xbf16> to vector<1x1x8x128xbf16>
      tpu.vector_store %arg5[%c0_22, %c1_23, %c0_24, %c0_25], %87 {strides = array<i32>} : memref<1x4x8x128xbf16, #tpu.memory_space<vmem>>, vector<1x1x8x128xbf16>,
      %88 = arith.index_cast %arg2 : i32 to index
      %c2 = arith.constant 2 : index
      %c0_26 = arith.constant 0 : index
      %c0_27 = arith.constant 0 : index
      %89 = vector.load %arg7[%88, %c2, %c0_26, %c0_27] : memref<1x4x64x16xf32, #tpu.memory_space<vmem>>, vector<1x1x64x16xf32>
      %90 = vector.shape_cast %89 : vector<1x1x64x16xf32> to vector<64x16xf32>
      %91 = vector.broadcast %15 : vector<1x16xf32> to vector<64x16xf32>
      %92 = arith.subf %90, %91 : vector<64x16xf32>
      %93 = vector.broadcast %25 : vector<1x16xf32> to vector<64x16xf32>
      %94 = arith.mulf %92, %93 : vector<64x16xf32>
      %cst_28 = arith.constant 0.000000e+00 : f32
      %95 = vector.broadcast %cst_28 : f32 to vector<64x16xf32>
      %96 = arith.maximumf %94, %95 : vector<64x16xf32>
      %97 = vector.shape_cast %96 : vector<64x16xf32> to vector<8x8x16xf32>
      %98 = vector.extract_strided_slice %97 {offsets = [0, 0, 0], sizes = [8, 1, 16], strides = [1, 1, 1]} : vector<8x8x16xf32> to vector<8x1x16xf32>
      %99 = vector.shape_cast %98 : vector<8x1x16xf32> to vector<8x16xf32>
      %100 = vector.extract_strided_slice %97 {offsets = [0, 1, 0], sizes = [8, 1, 16], strides = [1, 1, 1]} : vector<8x8x16xf32> to vector<8x1x16xf32>
      %101 = vector.shape_cast %100 : vector<8x1x16xf32> to vector<8x16xf32>
      %102 = vector.extract_strided_slice %97 {offsets = [0, 2, 0], sizes = [8, 1, 16], strides = [1, 1, 1]} : vector<8x8x16xf32> to vector<8x1x16xf32>
      %103 = vector.shape_cast %102 : vector<8x1x16xf32> to vector<8x16xf32>
      %104 = vector.extract_strided_slice %97 {offsets = [0, 3, 0], sizes = [8, 1, 16], strides = [1, 1, 1]} : vector<8x8x16xf32> to vector<8x1x16xf32>
      %105 = vector.shape_cast %104 : vector<8x1x16xf32> to vector<8x16xf32>
      %106 = vector.extract_strided_slice %97 {offsets = [0, 4, 0], sizes = [8, 1, 16], strides = [1, 1, 1]} : vector<8x8x16xf32> to vector<8x1x16xf32>
      %107 = vector.shape_cast %106 : vector<8x1x16xf32> to vector<8x16xf32>
      %108 = vector.extract_strided_slice %97 {offsets = [0, 5, 0], sizes = [8, 1, 16], strides = [1, 1, 1]} : vector<8x8x16xf32> to vector<8x1x16xf32>
      %109 = vector.shape_cast %108 : vector<8x1x16xf32> to vector<8x16xf32>
      %110 = vector.extract_strided_slice %97 {offsets = [0, 6, 0], sizes = [8, 1, 16], strides = [1, 1, 1]} : vector<8x8x16xf32> to vector<8x1x16xf32>
      %111 = vector.shape_cast %110 : vector<8x1x16xf32> to vector<8x16xf32>
      %112 = vector.extract_strided_slice %97 {offsets = [0, 7, 0], sizes = [8, 1, 16], strides = [1, 1, 1]} : vector<8x8x16xf32> to vector<8x1x16xf32>
      %113 = vector.shape_cast %112 : vector<8x1x16xf32> to vector<8x16xf32>
      %114 = tpu.concatenate %99, %101, %103, %105, %107, %109, %111, %113 in 1 : vector<8x16xf32>, vector<8x16xf32>, vector<8x16xf32>, vector<8x16xf32>, vector<8x16xf32>, vector<8x16xf32>, vector<8x16xf32>, vector<8x16xf32> -> vector<8x128xf32>
      %115 = arith.truncf %114 : vector<8x128xf32> to vector<8x128xbf16>
      %c0_29 = arith.constant 0 : index
      %c2_30 = arith.constant 2 : index
      %c0_31 = arith.constant 0 : index
      %c0_32 = arith.constant 0 : index
      %116 = vector.load %arg5[%c0_29, %c2_30, %c0_31, %c0_32] : memref<1x4x8x128xbf16, #tpu.memory_space<vmem>>, vector<1x1x8x128xbf16>
      %117 = vector.shape_cast %116 : vector<1x1x8x128xbf16> to vector<8x128xbf16>
      %118 = vector.shape_cast %115 : vector<8x128xbf16> to vector<1x1x8x128xbf16>
      tpu.vector_store %arg5[%c0_29, %c2_30, %c0_31, %c0_32], %118 {strides = array<i32>} : memref<1x4x8x128xbf16, #tpu.memory_space<vmem>>, vector<1x1x8x128xbf16>,
      %119 = arith.index_cast %arg2 : i32 to index
      %c3 = arith.constant 3 : index
      %c0_33 = arith.constant 0 : index
      %c0_34 = arith.constant 0 : index
      %120 = vector.load %arg7[%119, %c3, %c0_33, %c0_34] : memref<1x4x64x16xf32, #tpu.memory_space<vmem>>, vector<1x1x64x16xf32>
      %121 = vector.shape_cast %120 : vector<1x1x64x16xf32> to vector<64x16xf32>
      %122 = vector.broadcast %15 : vector<1x16xf32> to vector<64x16xf32>
      %123 = arith.subf %121, %122 : vector<64x16xf32>
      %124 = vector.broadcast %25 : vector<1x16xf32> to vector<64x16xf32>
      %125 = arith.mulf %123, %124 : vector<64x16xf32>
      %cst_35 = arith.constant 0.000000e+00 : f32
      %126 = vector.broadcast %cst_35 : f32 to vector<64x16xf32>
      %127 = arith.maximumf %125, %126 : vector<64x16xf32>
      %128 = vector.shape_cast %127 : vector<64x16xf32> to vector<8x8x16xf32>
      %129 = vector.extract_strided_slice %128 {offsets = [0, 0, 0], sizes = [8, 1, 16], strides = [1, 1, 1]} : vector<8x8x16xf32> to vector<8x1x16xf32>
      %130 = vector.shape_cast %129 : vector<8x1x16xf32> to vector<8x16xf32>
      %131 = vector.extract_strided_slice %128 {offsets = [0, 1, 0], sizes = [8, 1, 16], strides = [1, 1, 1]} : vector<8x8x16xf32> to vector<8x1x16xf32>
      %132 = vector.shape_cast %131 : vector<8x1x16xf32> to vector<8x16xf32>
      %133 = vector.extract_strided_slice %128 {offsets = [0, 2, 0], sizes = [8, 1, 16], strides = [1, 1, 1]} : vector<8x8x16xf32> to vector<8x1x16xf32>
      %134 = vector.shape_cast %133 : vector<8x1x16xf32> to vector<8x16xf32>
      %135 = vector.extract_strided_slice %128 {offsets = [0, 3, 0], sizes = [8, 1, 16], strides = [1, 1, 1]} : vector<8x8x16xf32> to vector<8x1x16xf32>
      %136 = vector.shape_cast %135 : vector<8x1x16xf32> to vector<8x16xf32>
      %137 = vector.extract_strided_slice %128 {offsets = [0, 4, 0], sizes = [8, 1, 16], strides = [1, 1, 1]} : vector<8x8x16xf32> to vector<8x1x16xf32>
      %138 = vector.shape_cast %137 : vector<8x1x16xf32> to vector<8x16xf32>
      %139 = vector.extract_strided_slice %128 {offsets = [0, 5, 0], sizes = [8, 1, 16], strides = [1, 1, 1]} : vector<8x8x16xf32> to vector<8x1x16xf32>
      %140 = vector.shape_cast %139 : vector<8x1x16xf32> to vector<8x16xf32>
      %141 = vector.extract_strided_slice %128 {offsets = [0, 6, 0], sizes = [8, 1, 16], strides = [1, 1, 1]} : vector<8x8x16xf32> to vector<8x1x16xf32>
      %142 = vector.shape_cast %141 : vector<8x1x16xf32> to vector<8x16xf32>
      %143 = vector.extract_strided_slice %128 {offsets = [0, 7, 0], sizes = [8, 1, 16], strides = [1, 1, 1]} : vector<8x8x16xf32> to vector<8x1x16xf32>
      %144 = vector.shape_cast %143 : vector<8x1x16xf32> to vector<8x16xf32>
      %145 = tpu.concatenate %130, %132, %134, %136, %138, %140, %142, %144 in 1 : vector<8x16xf32>, vector<8x16xf32>, vector<8x16xf32>, vector<8x16xf32>, vector<8x16xf32>, vector<8x16xf32>, vector<8x16xf32>, vector<8x16xf32> -> vector<8x128xf32>
      %146 = arith.truncf %145 : vector<8x128xf32> to vector<8x128xbf16>
      %c0_36 = arith.constant 0 : index
      %c3_37 = arith.constant 3 : index
      %c0_38 = arith.constant 0 : index
      %c0_39 = arith.constant 0 : index
      %147 = vector.load %arg5[%c0_36, %c3_37, %c0_38, %c0_39] : memref<1x4x8x128xbf16, #tpu.memory_space<vmem>>, vector<1x1x8x128xbf16>
      %148 = vector.shape_cast %147 : vector<1x1x8x128xbf16> to vector<8x128xbf16>
      %149 = vector.shape_cast %146 : vector<8x128xbf16> to vector<1x1x8x128xbf16>
      tpu.vector_store %arg5[%c0_36, %c3_37, %c0_38, %c0_39], %149 {strides = array<i32>} : memref<1x4x8x128xbf16, #tpu.memory_space<vmem>>, vector<1x1x8x128xbf16>,
    } else {
    }
    return
  }
  func.func @transform_0(%arg0: i32, %arg1: i32, %arg2: i32) -> (i32, i32, i32, i32) {
    %c0_i32 = arith.constant 0 : i32
    %c0_i32_0 = arith.constant 0 : i32
    %c0_i32_1 = arith.constant 0 : i32
    %c0_i32_2 = arith.constant 0 : i32
    return %arg0, %c0_i32, %c0_i32_0, %c0_i32_1 : i32, i32, i32, i32
  }
  func.func @transform_1(%arg0: i32, %arg1: i32, %arg2: i32) -> (i32, i32, i32) {
    %c0_i32 = arith.constant 0 : i32
    %c0_i32_0 = arith.constant 0 : i32
    %c0_i32_1 = arith.constant 0 : i32
    %c0_i32_2 = arith.constant 0 : i32
    return %c0_i32, %c0_i32_0, %c0_i32_1 : i32, i32, i32
  }
  func.func @transform_2(%arg0: i32, %arg1: i32, %arg2: i32) -> (i32, i32, i32, i32) {
    %0 = arith.muli %arg1, %arg2 : i32
    %c0_i32 = arith.constant 0 : i32
    %c0_i32_0 = arith.constant 0 : i32
    %c0_i32_1 = arith.constant 0 : i32
    return %arg0, %c0_i32, %0, %c0_i32_0 : i32, i32, i32, i32
  }
}

</mosaic_0001>

<llo_original>
// kernel: tpu_custom_call.1
$region0: #{tpu_custom_call.1}
  #allocation0 [shape = 'u32[]', space=smem, size = 0x4, offset = 0x4, fixed_abs, tag = 'smem constant byte address 0x4 - core index']
  #allocation1 [shape = 'u32[144,128]{1,0:T(1,128)}', space=vmem, size = 0x12000, scoped, tag = 'internal scratch']
  #allocation2 [shape = 'f32[2,16]{1,0:T(2,128)}', space=vmem, size = 0x400, scoped, tag = 'scratch operand']
  #allocation3 [shape = 'f32[1,4,64,16]{3,2,1,0:T(8,128)}', space=vmem, size = 0x20000, scoped, tag = 'scratch operand']
  %s0 = inlined_call_operand.vmem [shape: bf16[2,10,10,32], index: 0, kind: input, shape index: {}]
  %s1 = inlined_call_operand.vmem [shape: bf16[4,128,16], index: 1, kind: input, shape index: {}]
  %s2 = inlined_call_operand.hbm [shape: bf16[2,4,8,128], index: 2, kind: output, shape index: {}]
  %s3 = sld [smem:[#allocation0]]
  $region53: #{tpu_custom_call.1} parent=0
    _
  %s5 = ssub.s32 1, %s3
  %s6 = scalar_select 0, %s5, %s3
  $region1: #{tpu_custom_call.1} parent=0
    #allocation4 [shape = 'u8[16384]{0}', space=vmem, size = 0x4000, scoped, tag = 'output window, operand 0']
    #allocation5 [shape = 's32[2]{0}', space=sflag, size = 0x8, scoped, tag = 'scoped memory for tpu_custom_call.1']
    %7 = vsyncpa [#allocation5], 0
    %s8 = scalar_lea.sflag [#allocation5], 1
    %9 = vsyncpa %s8, 0
    loop: start=0, step=1, limit=6
    $region2: #{tpu_custom_call.1} parent=1 // loop_pre_header
      _
    $region3: #{tpu_custom_call.1} parent=1 // loop_header
      %s11 = sphi 0, %s15
      %p12 = scmp.ge.s32.totalorder %s11, 6
      %s18 = sphi 0, %s37
      %s19 = sphi 0, %s33
      %s20 = sphi 0, %s29
      %s21 = sphi 0, %s18
      %s22 = sphi 0, %s19
      %s23 = sphi 0, %s20
      %s24 = sphi 0, %s21
      %s25 = sphi 0, %s22
      %s26 = sphi 0, %s23
      %s40 = sphi 0, %s42
      %s43 = sphi 0, %s40
      %s44 = sphi 0, %s43
      %s60 = sphi 0, %s44
      %s64 = sphi 0, %s64
      %s66 = sphi 0, %s64
      %s67 = sphi 0, %s66
      %s81 = sphi 0, %s67
      %s91 = sphi 0, %s93
      %s94 = sphi 0, %s91
      %s95 = sphi 0, %s94
      %s111 = sphi 0, %s95
    $region4: #{tpu_custom_call.1} parent=1 // loop_header_branch
      %14 = sbr.rel (%p12) target = $region8
    $region5: #{tpu_custom_call.1} parent=1 // loop_body
      %s16 = ssub.s32 %s11, 1
      %s17 = ssub.s32 %s11, 2
      %s27 = sadd.s32 1, %s20
      %p28 = scmp.ge.s32.totalorder %s27, 1
      %s29 = scalar_select %p28, 0, %s27
      %s30 = sadd.s32 1, %s19
      %s31 = scalar_select %p28, %s30, %s19
      %p32 = scmp.ge.s32.totalorder %s31, 2
      %s33 = scalar_select %p32, 0, %s31
      %s34 = sadd.s32 1, %s18
      %s35 = scalar_select %p32, %s34, %s18
      %p36 = scmp.ge.s32.totalorder %s35, 2
      %s37 = scalar_select %p36, 0, %s35
      %s38 = ssub.s32 %s18, %s37
      %p39 = scmp.eq.s32.totalorder %s38, 0
      %s41 = sadd.s32 %s40, 1
      %s42 = scalar_select %p39, %s40, %s41
      %p45 = pneg %p39
      %p46 = scmp.eq.s32.totalorder %s11, 3
      %p47 = por %p45, %p46
      %p48 = scmp.ne.s32.totalorder %s40, %s43
      %p49 = scmp.eq.s32.totalorder %s11, 0
      %p50 = por %p48, %p49
      %p51 = scmp.ne.s32.totalorder %s40, %s43
      %p52 = scmp.eq.s32.totalorder %s16, 3
      %p53 = por %p51, %p52
      %p54 = scmp.ne.s32.totalorder %s43, %s44
      %p55 = scmp.eq.s32.totalorder %s16, 0
      %p56 = por %p54, %p55
      %p57 = scmp.ne.s32.totalorder %s43, %s44
      %p58 = scmp.eq.s32.totalorder %s17, 3
      %p59 = por %p57, %p58
      %p61 = scmp.ne.s32.totalorder %s44, %s60
      %p62 = scmp.eq.s32.totalorder %s17, 0
      %p63 = por %p61, %p62
      %s65 = sadd.s32 %s64, 1
      %p68 = scmp.eq.s32.totalorder %s11, 3
      %p69 = scmp.ne.s32.totalorder %s64, %s66
      %p70 = scmp.eq.s32.totalorder %s11, 0
      %p71 = por %p69, %p70
      %p72 = scmp.ne.s32.totalorder %s64, %s66
      %p73 = scmp.eq.s32.totalorder %s16, 3
      %p74 = por %p72, %p73
      %p75 = scmp.ne.s32.totalorder %s66, %s67
      %p76 = scmp.eq.s32.totalorder %s16, 0
      %p77 = por %p75, %p76
      %p78 = scmp.ne.s32.totalorder %s66, %s67
      %p79 = scmp.eq.s32.totalorder %s17, 3
      %p80 = por %p78, %p79
      %p82 = scmp.ne.s32.totalorder %s67, %s81
      %p83 = scmp.eq.s32.totalorder %s17, 0
      %p84 = por %p82, %p83
      %s85 = smul.u32 %s19, %s20
      %s86 = smul.u32 %s33, %s29
      %s87 = ssub.s32 %s18, %s37
      %s88 = ssub.s32 %s85, %s86
      %s89 = sor.u32 %s87, %s88
      %p90 = scmp.eq.s32.totalorder %s89, 0
      %s92 = sadd.s32 %s91, 1
      %s93 = scalar_select %p90, %s91, %s92
      %p96 = pneg %p90
      %p97 = scmp.eq.s32.totalorder %s11, 3
      %p98 = por %p96, %p97
      %p99 = scmp.ne.s32.totalorder %s91, %s94
      %p100 = scmp.eq.s32.totalorder %s11, 0
      %p101 = por %p99, %p100
      %p102 = scmp.ne.s32.totalorder %s91, %s94
      %p103 = scmp.eq.s32.totalorder %s16, 3
      %p104 = por %p102, %p103
      %p105 = scmp.ne.s32.totalorder %s94, %s95
      %p106 = scmp.eq.s32.totalorder %s16, 0
      %p107 = por %p105, %p106
      %p108 = scmp.ne.s32.totalorder %s94, %s95
      %p109 = scmp.eq.s32.totalorder %s17, 3
      %p110 = por %p108, %p109
      %p112 = scmp.ne.s32.totalorder %s95, %s111
      %p113 = scmp.eq.s32.totalorder %s17, 0
      %p114 = por %p112, %p113
      %p115 = scmp.le.s32.totalorder 1, %s11
      %p116 = scmp.lt.s32.totalorder %s11, 5
      %p117 = pnand %p115, %p116
      %p118 = pneg %p117
      // Predicated region
      $region9: #{tpu_custom_call.1} parent=5 // pred_check
        _
      $region10: #{tpu_custom_call.1} parent=5 // pred_check_branch
        %120 = sbr.rel (%p117) target = $region12
      $region11: #{tpu_custom_call.1} parent=5 // pred_region
        %s121 = ssub.s32 %s11, 1
        // Predicated region
        $region13: #{tpu_custom_call.1} parent=11 // pred_check
          %p122 = pneg %p77
        $region14: #{tpu_custom_call.1} parent=11 // pred_check_branch
          %124 = sbr.rel (%p122) target = $region16
        $region15: #{tpu_custom_call.1} parent=11 // pred_region
          _
        $region16: #{tpu_custom_call.1} parent=11 // pred_fallthru
          _
      $region12: #{tpu_custom_call.1} parent=5 // pred_fallthru
        _
      %p125 = scmp.lt.s32.totalorder %s11, 4
      // Predicated region
      $region17: #{tpu_custom_call.1} parent=5 // pred_check
        %p126 = pneg %p125
      $region18: #{tpu_custom_call.1} parent=5 // pred_check_branch
        %128 = sbr.rel (%p126) target = $region20
      $region19: #{tpu_custom_call.1} parent=5 // pred_region
        // Predicated region
        $region21: #{tpu_custom_call.1} parent=19 // pred_check
          %p129 = pneg %p50
        $region22: #{tpu_custom_call.1} parent=19 // pred_check_branch
          %131 = sbr.rel (%p129) target = $region24
        $region23: #{tpu_custom_call.1} parent=19 // pred_region
          %p132 = scmp.lt.s32.totalorder %s18, 1
          %s133 = scalar_select %p132, %s18, 1
          %s134 = smul.addr %s133, 20
          %s135 = smul.addr %s134, 4
          %s136 = scalar_lea.vmem %s0, %s135
        $region24: #{tpu_custom_call.1} parent=19 // pred_fallthru
          _
      $region20: #{tpu_custom_call.1} parent=5 // pred_fallthru
        _
      %p137 = scmp.le.s32.totalorder 1, %s11
      %p138 = scmp.lt.s32.totalorder %s11, 5
      %p139 = pnand %p137, %p138
      %p140 = pneg %p139
      // Predicated region
      $region25: #{tpu_custom_call.1} parent=5 // pred_check
        _
      $region26: #{tpu_custom_call.1} parent=5 // pred_check_branch
        %142 = sbr.rel (%p139) target = $region28
      $region27: #{tpu_custom_call.1} parent=5 // pred_region
        %s143 = ssub.s32 %s11, 1
        %p144 = scmp.lt.s32.totalorder %s21, 1
        %s145 = scalar_select %p144, %s21, 1
        %s146 = smul.addr %s145, 20
        %s147 = smul.addr %s146, 4
        %s148 = scalar_lea.vmem %s0, %s147
        %p149 = pneg %p56
        %p150 = pneg %p53
        %p151 = pneg %p77
        %p152 = pneg %p74
        %p153 = pneg %p107
        %p154 = pneg %p104
        %s155 = sand.u32 %s94, 1
        %s156 = scalar_lea.sflag [#allocation5], %s155
        %s157 = sand.u32 %s94, 1
        %s158 = smul.addr %s157, 16
        %s159 = scalar_lea.vmem [#allocation4], %s158
        %p160 = scmp.lt.s32.totalorder %s21, 1
        %s161 = scalar_select %p160, %s21, 1
        %s162 = smul.addr %s161, 20
        %s163 = smul.addr %s162, 4
        %s164 = scalar_lea.vmem %s0, %s163
        %s165 = smul.u32 %s22, %s23
        %s167 = smul.u32 %s23, 8
        %p168 = scmp.eq.s32.totalorder %s22, 0
        %p169 = scmp.eq.s32.totalorder %s23, 0
        %p170 = pnand %p168, %p169
        %p171 = pneg %p170
        // Predicated region
        $region29: #{tpu_custom_call.1} parent=27 // pred_check
          _
        $region30: #{tpu_custom_call.1} parent=27 // pred_check_branch
          %173 = sbr.rel (%p170) target = $region32
        $region31: #{tpu_custom_call.1} parent=27 // pred_region
          %vm174 = vcmask 123904
          %175 = vst.msk [vmem:[#allocation2] sm:$0x3] %vm174, 0.0
        $region32: #{tpu_custom_call.1} parent=27 // pred_fallthru
          _
        // Predicated region
        $region33: #{tpu_custom_call.1} parent=27 // pred_check
          %p176 = pneg %p168
        $region34: #{tpu_custom_call.1} parent=27 // pred_check_branch
          %178 = sbr.rel (%p176) target = $region36
        $region35: #{tpu_custom_call.1} parent=27 // pred_region
          %s179 = smul.u32 %s167, 2
          %s180 = smul.addr %s179, 4
          %s181 = scalar_lea.vmem %s164, %s180
          %v182 = vld [vmem:[%s181] sm:$0xf]
          %v183 = vld [vmem:[%s181 + $0x8] sm:$0xf]
          %v184 = vld [vmem:[%s181 + $0x10] sm:$0xf]
          %v185 = vld [vmem:[%s181 + $0x18] sm:$0xf]
          %v186 = vld [vmem:[%s181 + $0x20] sm:$0xf]
          %v187 = vld [vmem:[%s181 + $0x28] sm:$0xf]
          %v188 = vld [vmem:[%s181 + $0x30] sm:$0xf]
          %v189 = vld [vmem:[%s181 + $0x38] sm:$0xf]
          %v190 = vld [vmem:[%s181 + $0x4] sm:$0x1]
          %v191 = vld [vmem:[%s181 + $0xc] sm:$0x1]
          %v192 = vld [vmem:[%s181 + $0x14] sm:$0x1]
          %v193 = vld [vmem:[%s181 + $0x1c] sm:$0x1]
          %v194 = vld [vmem:[%s181 + $0x24] sm:$0x1]
          %v195 = vld [vmem:[%s181 + $0x2c] sm:$0x1]
          %v196 = vld [vmem:[%s181 + $0x34] sm:$0x1]
          %v197 = vld [vmem:[%s181 + $0x3c] sm:$0x1]
          %vm198 = vsmask.f32 3328
          %vm199 = vsmask.f32 7440
          %vm200 = vmor %vm198, %vm199
          %v202 = vshrl.u32 %v182, 16
          %v204 = vrot.slane %v202, 4
          %v205 = vshll.u32 %v182, 16
          %v207 = vrot.slane %v205, 5
          %v208 = vor.u32 %v204, %v207
          %v209 = vrot.slane %v208, 4
          %v211 = vshll.u32 %v190, 16
          %v213 = vrot.slane %v211, 5
          %v214 = vsel %vm200, %v209, %v213
          %v216 = vshrl.u32 %v183, 16
          %v218 = vrot.slane %v216, 4
          %v219 = vshll.u32 %v183, 16
          %v221 = vrot.slane %v219, 5
          %v222 = vor.u32 %v218, %v221
          %v223 = vrot.slane %v222, 4
          %v225 = vshll.u32 %v191, 16
          %v227 = vrot.slane %v225, 5
          %v228 = vsel %vm200, %v223, %v227
          %v230 = vshrl.u32 %v184, 16
          %v232 = vrot.slane %v230, 4
          %v233 = vshll.u32 %v184, 16
          %v235 = vrot.slane %v233, 5
          %v236 = vor.u32 %v232, %v235
          %v237 = vrot.slane %v236, 4
          %v239 = vshll.u32 %v192, 16
          %v241 = vrot.slane %v239, 5
          %v242 = vsel %vm200, %v237, %v241
          %v244 = vshrl.u32 %v185, 16
          %v246 = vrot.slane %v244, 4
          %v247 = vshll.u32 %v185, 16
          %v249 = vrot.slane %v247, 5
          %v250 = vor.u32 %v246, %v249
          %v251 = vrot.slane %v250, 4
          %v253 = vshll.u32 %v193, 16
          %v255 = vrot.slane %v253, 5
          %v256 = vsel %vm200, %v251, %v255
          %v258 = vshrl.u32 %v186, 16
          %v260 = vrot.slane %v258, 4
          %v261 = vshll.u32 %v186, 16
          %v263 = vrot.slane %v261, 5
          %v264 = vor.u32 %v260, %v263
          %v265 = vrot.slane %v264, 4
          %v267 = vshll.u32 %v194, 16
          %v269 = vrot.slane %v267, 5
          %v270 = vsel %vm200, %v265, %v269
          %v272 = vshrl.u32 %v187, 16
          %v274 = vrot.slane %v272, 4
          %v275 = vshll.u32 %v187, 16
          %v277 = vrot.slane %v275, 5
          %v278 = vor.u32 %v274, %v277
          %v279 = vrot.slane %v278, 4
          %v281 = vshll.u32 %v195, 16
          %v283 = vrot.slane %v281, 5
          %v284 = vsel %vm200, %v279, %v283
          %v286 = vshrl.u32 %v188, 16
          %v288 = vrot.slane %v286, 4
          %v289 = vshll.u32 %v188, 16
          %v291 = vrot.slane %v289, 5
          %v292 = vor.u32 %v288, %v291
          %v293 = vrot.slane %v292, 4
          %v295 = vshll.u32 %v196, 16
          %v297 = vrot.slane %v295, 5
          %v298 = vsel %vm200, %v293, %v297
          %v300 = vshrl.u32 %v189, 16
          %v302 = vrot.slane %v300, 4
          %v303 = vshll.u32 %v189, 16
          %v305 = vrot.slane %v303, 5
          %v306 = vor.u32 %v302, %v305
          %v307 = vrot.slane %v306, 4
          %v309 = vshll.u32 %v197, 16
          %v311 = vrot.slane %v309, 5
          %v312 = vsel %vm200, %v307, %v311
          %v313 = vld [vmem:[%s181] sm:$0xe]
          %v314 = vld [vmem:[%s181 + $0x8] sm:$0xe]
          %v315 = vld [vmem:[%s181 + $0x10] sm:$0xe]
          %v316 = vld [vmem:[%s181 + $0x18] sm:$0xe]
          %v317 = vld [vmem:[%s181 + $0x20] sm:$0xe]
          %v318 = vld [vmem:[%s181 + $0x28] sm:$0xe]
          %v319 = vld [vmem:[%s181 + $0x30] sm:$0xe]
          %v320 = vld [vmem:[%s181 + $0x38] sm:$0xe]
          %vm337 = vcmask 1042432
          %vm338 = vcmask 1046532
          %vm339 = vmor %vm337, %vm338
          %v340 = vrot.slane %v313, 5
          %v341 = vrot.slane %v340, 4
          %v342 = vrot.slane %v190, 5
          %v343 = vsel %vm339, %v341, %v342
          %v344 = vrot.slane %v314, 5
          %v345 = vrot.slane %v344, 4
          %v346 = vrot.slane %v191, 5
          %v347 = vsel %vm339, %v345, %v346
          %v348 = vrot.slane %v315, 5
          %v349 = vrot.slane %v348, 4
          %v350 = vrot.slane %v192, 5
          %v351 = vsel %vm339, %v349, %v350
          %v352 = vrot.slane %v316, 5
          %v353 = vrot.slane %v352, 4
          %v354 = vrot.slane %v193, 5
          %v355 = vsel %vm339, %v353, %v354
          %v356 = vrot.slane %v317, 5
          %v357 = vrot.slane %v356, 4
          %v358 = vrot.slane %v194, 5
          %v359 = vsel %vm339, %v357, %v358
          %v360 = vrot.slane %v318, 5
          %v361 = vrot.slane %v360, 4
          %v362 = vrot.slane %v195, 5
          %v363 = vsel %vm339, %v361, %v362
          %v364 = vrot.slane %v319, 5
          %v365 = vrot.slane %v364, 4
          %v366 = vrot.slane %v196, 5
          %v367 = vsel %vm339, %v365, %v366
          %v368 = vrot.slane %v320, 5
          %v369 = vrot.slane %v368, 4
          %v370 = vrot.slane %v197, 5
          %v371 = vsel %vm339, %v369, %v370
          %s372 = sadd.s32 %s167, 1
          %s373 = smul.u32 %s372, 2
          %s374 = smul.addr %s373, 4
          %s375 = scalar_lea.vmem %s164, %s374
          %v376 = vld [vmem:[%s375] sm:$0xf]
          %v377 = vld [vmem:[%s375 + $0x8] sm:$0xf]
          %v378 = vld [vmem:[%s375 + $0x10] sm:$0xf]
          %v379 = vld [vmem:[%s375 + $0x18] sm:$0xf]
          %v380 = vld [vmem:[%s375 + $0x20] sm:$0xf]
          %v381 = vld [vmem:[%s375 + $0x28] sm:$0xf]
          %v382 = vld [vmem:[%s375 + $0x30] sm:$0xf]
          %v383 = vld [vmem:[%s375 + $0x38] sm:$0xf]
          %v384 = vld [vmem:[%s375 + $0x4] sm:$0x1]
          %v385 = vld [vmem:[%s375 + $0xc] sm:$0x1]
          %v386 = vld [vmem:[%s375 + $0x14] sm:$0x1]
          %v387 = vld [vmem:[%s375 + $0x1c] sm:$0x1]
          %v388 = vld [vmem:[%s375 + $0x24] sm:$0x1]
          %v389 = vld [vmem:[%s375 + $0x2c] sm:$0x1]
          %v390 = vld [vmem:[%s375 + $0x34] sm:$0x1]
          %v391 = vld [vmem:[%s375 + $0x3c] sm:$0x1]
          %v393 = vshrl.u32 %v376, 16
          %v395 = vrot.slane %v393, 4
          %v396 = vshll.u32 %v376, 16
          %v398 = vrot.slane %v396, 5
          %v399 = vor.u32 %v395, %v398
          %v400 = vrot.slane %v399, 4
          %v402 = vshll.u32 %v384, 16
          %v404 = vrot.slane %v402, 5
          %v405 = vsel %vm200, %v400, %v404
          %v407 = vshrl.u32 %v377, 16
          %v409 = vrot.slane %v407, 4
          %v410 = vshll.u32 %v377, 16
          %v412 = vrot.slane %v410, 5
          %v413 = vor.u32 %v409, %v412
          %v414 = vrot.slane %v413, 4
          %v416 = vshll.u32 %v385, 16
          %v418 = vrot.slane %v416, 5
          %v419 = vsel %vm200, %v414, %v418
          %v421 = vshrl.u32 %v378, 16
          %v423 = vrot.slane %v421, 4
          %v424 = vshll.u32 %v378, 16
          %v426 = vrot.slane %v424, 5
          %v427 = vor.u32 %v423, %v426
          %v428 = vrot.slane %v427, 4
          %v430 = vshll.u32 %v386, 16
          %v432 = vrot.slane %v430, 5
          %v433 = vsel %vm200, %v428, %v432
          %v435 = vshrl.u32 %v379, 16
          %v437 = vrot.slane %v435, 4
          %v438 = vshll.u32 %v379, 16
          %v440 = vrot.slane %v438, 5
          %v441 = vor.u32 %v437, %v440
          %v442 = vrot.slane %v441, 4
          %v444 = vshll.u32 %v387, 16
          %v446 = vrot.slane %v444, 5
          %v447 = vsel %vm200, %v442, %v446
          %v449 = vshrl.u32 %v380, 16
          %v451 = vrot.slane %v449, 4
          %v452 = vshll.u32 %v380, 16
          %v454 = vrot.slane %v452, 5
          %v455 = vor.u32 %v451, %v454
          %v456 = vrot.slane %v455, 4
          %v458 = vshll.u32 %v388, 16
          %v460 = vrot.slane %v458, 5
          %v461 = vsel %vm200, %v456, %v460
          %v463 = vshrl.u32 %v381, 16
          %v465 = vrot.slane %v463, 4
          %v466 = vshll.u32 %v381, 16
          %v468 = vrot.slane %v466, 5
          %v469 = vor.u32 %v465, %v468
          %v470 = vrot.slane %v469, 4
          %v472 = vshll.u32 %v389, 16
          %v474 = vrot.slane %v472, 5
          %v475 = vsel %vm200, %v470, %v474
          %v477 = vshrl.u32 %v382, 16
          %v479 = vrot.slane %v477, 4
          %v480 = vshll.u32 %v382, 16
          %v482 = vrot.slane %v480, 5
          %v483 = vor.u32 %v479, %v482
          %v484 = vrot.slane %v483, 4
          %v486 = vshll.u32 %v390, 16
          %v488 = vrot.slane %v486, 5
          %v489 = vsel %vm200, %v484, %v488
          %v491 = vshrl.u32 %v383, 16
          %v493 = vrot.slane %v491, 4
          %v494 = vshll.u32 %v383, 16
          %v496 = vrot.slane %v494, 5
          %v497 = vor.u32 %v493, %v496
          %v498 = vrot.slane %v497, 4
          %v500 = vshll.u32 %v391, 16
          %v502 = vrot.slane %v500, 5
          %v503 = vsel %vm200, %v498, %v502
          %v504 = vld [vmem:[%s375] sm:$0xe]
          %v505 = vld [vmem:[%s375 + $0x8] sm:$0xe]
          %v506 = vld [vmem:[%s375 + $0x10] sm:$0xe]
          %v507 = vld [vmem:[%s375 + $0x18] sm:$0xe]
          %v508 = vld [vmem:[%s375 + $0x20] sm:$0xe]
          %v509 = vld [vmem:[%s375 + $0x28] sm:$0xe]
          %v510 = vld [vmem:[%s375 + $0x30] sm:$0xe]
          %v511 = vld [vmem:[%s375 + $0x38] sm:$0xe]
          %v528 = vrot.slane %v504, 5
          %v529 = vrot.slane %v528, 4
          %v530 = vrot.slane %v384, 5
          %v531 = vsel %vm339, %v529, %v530
          %v532 = vrot.slane %v505, 5
          %v533 = vrot.slane %v532, 4
          %v534 = vrot.slane %v385, 5
          %v535 = vsel %vm339, %v533, %v534
          %v536 = vrot.slane %v506, 5
          %v537 = vrot.slane %v536, 4
          %v538 = vrot.slane %v386, 5
          %v539 = vsel %vm339, %v537, %v538
          %v540 = vrot.slane %v507, 5
          %v541 = vrot.slane %v540, 4
          %v542 = vrot.slane %v387, 5
          %v543 = vsel %vm339, %v541, %v542
          %v544 = vrot.slane %v508, 5
          %v545 = vrot.slane %v544, 4
          %v546 = vrot.slane %v388, 5
          %v547 = vsel %vm339, %v545, %v546
          %v548 = vrot.slane %v509, 5
          %v549 = vrot.slane %v548, 4
          %v550 = vrot.slane %v389, 5
          %v551 = vsel %vm339, %v549, %v550
          %v552 = vrot.slane %v510, 5
          %v553 = vrot.slane %v552, 4
          %v554 = vrot.slane %v390, 5
          %v555 = vsel %vm339, %v553, %v554
          %v556 = vrot.slane %v511, 5
          %v557 = vrot.slane %v556, 4
          %v558 = vrot.slane %v391, 5
          %v559 = vsel %vm339, %v557, %v558
          %s560 = sadd.s32 %s167, 2
          %s561 = smul.u32 %s560, 2
          %s562 = smul.addr %s561, 4
          %s563 = scalar_lea.vmem %s164, %s562
          %v564 = vld [vmem:[%s563] sm:$0xf]
          %v565 = vld [vmem:[%s563 + $0x8] sm:$0xf]
          %v566 = vld [vmem:[%s563 + $0x10] sm:$0xf]
          %v567 = vld [vmem:[%s563 + $0x18] sm:$0xf]
          %v568 = vld [vmem:[%s563 + $0x20] sm:$0xf]
          %v569 = vld [vmem:[%s563 + $0x28] sm:$0xf]
          %v570 = vld [vmem:[%s563 + $0x30] sm:$0xf]
          %v571 = vld [vmem:[%s563 + $0x38] sm:$0xf]
          %v572 = vld [vmem:[%s563 + $0x4] sm:$0x1]
          %v573 = vld [vmem:[%s563 + $0xc] sm:$0x1]
          %v574 = vld [vmem:[%s563 + $0x14] sm:$0x1]
          %v575 = vld [vmem:[%s563 + $0x1c] sm:$0x1]
          %v576 = vld [vmem:[%s563 + $0x24] sm:$0x1]
          %v577 = vld [vmem:[%s563 + $0x2c] sm:$0x1]
          %v578 = vld [vmem:[%s563 + $0x34] sm:$0x1]
          %v579 = vld [vmem:[%s563 + $0x3c] sm:$0x1]
          %v581 = vshrl.u32 %v564, 16
          %v583 = vrot.slane %v581, 4
          %v584 = vshll.u32 %v564, 16
          %v586 = vrot.slane %v584, 5
          %v587 = vor.u32 %v583, %v586
          %v588 = vrot.slane %v587, 4
          %v590 = vshll.u32 %v572, 16
          %v592 = vrot.slane %v590, 5
          %v593 = vsel %vm200, %v588, %v592
          %v595 = vshrl.u32 %v565, 16
          %v597 = vrot.slane %v595, 4
          %v598 = vshll.u32 %v565, 16
          %v600 = vrot.slane %v598, 5
          %v601 = vor.u32 %v597, %v600
          %v602 = vrot.slane %v601, 4
          %v604 = vshll.u32 %v573, 16
          %v606 = vrot.slane %v604, 5
          %v607 = vsel %vm200, %v602, %v606
          %v609 = vshrl.u32 %v566, 16
          %v611 = vrot.slane %v609, 4
          %v612 = vshll.u32 %v566, 16
          %v614 = vrot.slane %v612, 5
          %v615 = vor.u32 %v611, %v614
          %v616 = vrot.slane %v615, 4
          %v618 = vshll.u32 %v574, 16
          %v620 = vrot.slane %v618, 5
          %v621 = vsel %vm200, %v616, %v620
          %v623 = vshrl.u32 %v567, 16
          %v625 = vrot.slane %v623, 4
          %v626 = vshll.u32 %v567, 16
          %v628 = vrot.slane %v626, 5
          %v629 = vor.u32 %v625, %v628
          %v630 = vrot.slane %v629, 4
          %v632 = vshll.u32 %v575, 16
          %v634 = vrot.slane %v632, 5
          %v635 = vsel %vm200, %v630, %v634
          %v637 = vshrl.u32 %v568, 16
          %v639 = vrot.slane %v637, 4
          %v640 = vshll.u32 %v568, 16
          %v642 = vrot.slane %v640, 5
          %v643 = vor.u32 %v639, %v642
          %v644 = vrot.slane %v643, 4
          %v646 = vshll.u32 %v576, 16
          %v648 = vrot.slane %v646, 5
          %v649 = vsel %vm200, %v644, %v648
          %v651 = vshrl.u32 %v569, 16
          %v653 = vrot.slane %v651, 4
          %v654 = vshll.u32 %v569, 16
          %v656 = vrot.slane %v654, 5
          %v657 = vor.u32 %v653, %v656
          %v658 = vrot.slane %v657, 4
          %v660 = vshll.u32 %v577, 16
          %v662 = vrot.slane %v660, 5
          %v663 = vsel %vm200, %v658, %v662
          %v665 = vshrl.u32 %v570, 16
          %v667 = vrot.slane %v665, 4
          %v668 = vshll.u32 %v570, 16
          %v670 = vrot.slane %v668, 5
          %v671 = vor.u32 %v667, %v670
          %v672 = vrot.slane %v671, 4
          %v674 = vshll.u32 %v578, 16
          %v676 = vrot.slane %v674, 5
          %v677 = vsel %vm200, %v672, %v676
          %v679 = vshrl.u32 %v571, 16
          %v681 = vrot.slane %v679, 4
          %v682 = vshll.u32 %v571, 16
          %v684 = vrot.slane %v682, 5
          %v685 = vor.u32 %v681, %v684
          %v686 = vrot.slane %v685, 4
          %v688 = vshll.u32 %v579, 16
          %v690 = vrot.slane %v688, 5
          %v691 = vsel %vm200, %v686, %v690
          %v692 = vld [vmem:[%s563] sm:$0xe]
          %v693 = vld [vmem:[%s563 + $0x8] sm:$0xe]
          %v694 = vld [vmem:[%s563 + $0x10] sm:$0xe]
          %v695 = vld [vmem:[%s563 + $0x18] sm:$0xe]
          %v696 = vld [vmem:[%s563 + $0x20] sm:$0xe]
          %v697 = vld [vmem:[%s563 + $0x28] sm:$0xe]
          %v698 = vld [vmem:[%s563 + $0x30] sm:$0xe]
          %v699 = vld [vmem:[%s563 + $0x38] sm:$0xe]
          %v716 = vrot.slane %v692, 5
          %v717 = vrot.slane %v716, 4
          %v718 = vrot.slane %v572, 5
          %v719 = vsel %vm339, %v717, %v718
          %v720 = vrot.slane %v693, 5
          %v721 = vrot.slane %v720, 4
          %v722 = vrot.slane %v573, 5
          %v723 = vsel %vm339, %v721, %v722
          %v724 = vrot.slane %v694, 5
          %v725 = vrot.slane %v724, 4
          %v726 = vrot.slane %v574, 5
          %v727 = vsel %vm339, %v725, %v726
          %v728 = vrot.slane %v695, 5
          %v729 = vrot.slane %v728, 4
          %v730 = vrot.slane %v575, 5
          %v731 = vsel %vm339, %v729, %v730
          %v732 = vrot.slane %v696, 5
          %v733 = vrot.slane %v732, 4
          %v734 = vrot.slane %v576, 5
          %v735 = vsel %vm339, %v733, %v734
          %v736 = vrot.slane %v697, 5
          %v737 = vrot.slane %v736, 4
          %v738 = vrot.slane %v577, 5
          %v739 = vsel %vm339, %v737, %v738
          %v740 = vrot.slane %v698, 5
          %v741 = vrot.slane %v740, 4
          %v742 = vrot.slane %v578, 5
          %v743 = vsel %vm339, %v741, %v742
          %v744 = vrot.slane %v699, 5
          %v745 = vrot.slane %v744, 4
          %v746 = vrot.slane %v579, 5
          %v747 = vsel %vm339, %v745, %v746
          %v756 = vunpack.c.l.b16 %v182
          %v757 = vunpack.c.l.b16 %v183
          %v758 = vunpack.c.l.b16 %v184
          %v759 = vunpack.c.l.b16 %v185
          %v760 = vunpack.c.l.b16 %v186
          %v761 = vunpack.c.l.b16 %v187
          %v762 = vunpack.c.l.b16 %v188
          %v763 = vunpack.c.l.b16 %v189
          %v764 = vpack.c.b16 %v757, %v756
          %v765 = vpack.c.b16 %v759, %v758
          %v766 = vpack.c.b16 %v761, %v760
          %v767 = vpack.c.b16 %v763, %v762
          %v768 = vunpack.c.l.b16 %v214
          %v769 = vunpack.c.l.b16 %v228
          %v770 = vunpack.c.l.b16 %v242
          %v771 = vunpack.c.l.b16 %v256
          %v772 = vunpack.c.l.b16 %v270
          %v773 = vunpack.c.l.b16 %v284
          %v774 = vunpack.c.l.b16 %v298
          %v775 = vunpack.c.l.b16 %v312
          %v776 = vpack.c.b16 %v769, %v768
          %v777 = vpack.c.b16 %v771, %v770
          %v778 = vpack.c.b16 %v773, %v772
          %v779 = vpack.c.b16 %v775, %v774
          %780 = vrot.lane.b32.xlu0 %v776, 32
          %v781 = vpop.permute.xlu0 %780
          %782 = vrot.lane.b32.xlu0 %v777, 32
          %v783 = vpop.permute.xlu0 %782
          %784 = vrot.lane.b32.xlu0 %v778, 32
          %v785 = vpop.permute.xlu0 %784
          %786 = vrot.lane.b32.xlu0 %v779, 32
          %v787 = vpop.permute.xlu0 %786
          %v796 = vunpack.c.l.b16 %v376
          %v797 = vunpack.c.l.b16 %v377
          %v798 = vunpack.c.l.b16 %v378
          %v799 = vunpack.c.l.b16 %v379
          %v800 = vunpack.c.l.b16 %v380
          %v801 = vunpack.c.l.b16 %v381
          %v802 = vunpack.c.l.b16 %v382
          %v803 = vunpack.c.l.b16 %v383
          %v804 = vpack.c.b16 %v797, %v796
          %v805 = vpack.c.b16 %v799, %v798
          %v806 = vpack.c.b16 %v801, %v800
          %v807 = vpack.c.b16 %v803, %v802
          %808 = vrot.lane.b32.xlu0 %v804, 64
          %v809 = vpop.permute.xlu0 %808
          %810 = vrot.lane.b32.xlu0 %v805, 64
          %v811 = vpop.permute.xlu0 %810
          %812 = vrot.lane.b32.xlu0 %v806, 64
          %v813 = vpop.permute.xlu0 %812
          %814 = vrot.lane.b32.xlu0 %v807, 64
          %v815 = vpop.permute.xlu0 %814
          %v816 = vunpack.c.l.b16 %v405
          %v817 = vunpack.c.l.b16 %v419
          %v818 = vunpack.c.l.b16 %v433
          %v819 = vunpack.c.l.b16 %v447
          %v820 = vunpack.c.l.b16 %v461
          %v821 = vunpack.c.l.b16 %v475
          %v822 = vunpack.c.l.b16 %v489
          %v823 = vunpack.c.l.b16 %v503
          %v824 = vpack.c.b16 %v817, %v816
          %v825 = vpack.c.b16 %v819, %v818
          %v826 = vpack.c.b16 %v821, %v820
          %v827 = vpack.c.b16 %v823, %v822
          %828 = vrot.lane.b32.xlu0 %v824, 96
          %v829 = vpop.permute.xlu0 %828
          %830 = vrot.lane.b32.xlu0 %v825, 96
          %v831 = vpop.permute.xlu0 %830
          %832 = vrot.lane.b32.xlu0 %v826, 96
          %v833 = vpop.permute.xlu0 %832
          %834 = vrot.lane.b32.xlu0 %v827, 96
          %v835 = vpop.permute.xlu0 %834
          %vm836 = vcmask 261120
          %v839 = vsel %vm836, %v764, %v781
          %v842 = vsel %vm836, %v765, %v783
          %v845 = vsel %vm836, %v766, %v785
          %v848 = vsel %vm836, %v767, %v787
          %vm849 = vcmask 523264
          %v851 = vsel %vm849, %v839, %v809
          %v853 = vsel %vm849, %v842, %v811
          %v855 = vsel %vm849, %v845, %v813
          %v857 = vsel %vm849, %v848, %v815
          %vm858 = vcmask 785408
          %v860 = vsel %vm858, %v851, %v829
          %v863 = vsel %vm858, %v853, %v831
          %v866 = vsel %vm858, %v855, %v833
          %v869 = vsel %vm858, %v857, %v835
          %v871 = vld [vmem:[%s1] sm:$0xf]
          %v872 = vld [vmem:[%s1 + $0x4] sm:$0xf]
          %v873 = vld [vmem:[%s1 + $0x8] sm:$0xf]
          %v874 = vld [vmem:[%s1 + $0xc] sm:$0xf]
          %v875 = vld [vmem:[%s1 + $0x10] sm:$0xf]
          %v876 = vld [vmem:[%s1 + $0x14] sm:$0xf]
          %v877 = vld [vmem:[%s1 + $0x18] sm:$0xf]
          %v878 = vld [vmem:[%s1 + $0x1c] sm:$0xf]
          %v879 = vld [vmem:[%s1 + $0x20] sm:$0xf]
          %v880 = vld [vmem:[%s1 + $0x24] sm:$0xf]
          %v881 = vld [vmem:[%s1 + $0x28] sm:$0xf]
          %v882 = vld [vmem:[%s1 + $0x2c] sm:$0xf]
          %v883 = vld [vmem:[%s1 + $0x30] sm:$0xf]
          %v884 = vld [vmem:[%s1 + $0x34] sm:$0xf]
          %v885 = vld [vmem:[%s1 + $0x38] sm:$0xf]
          %v886 = vld [vmem:[%s1 + $0x3c] sm:$0xf]
          %v903 = vunpack.c.l.b16 %v871
          %v904 = vunpack.c.l.b16 %v872
          %v905 = vunpack.c.l.b16 %v873
          %v906 = vunpack.c.l.b16 %v874
          %v907 = vunpack.c.l.b16 %v875
          %v908 = vunpack.c.l.b16 %v876
          %v909 = vunpack.c.l.b16 %v877
          %v910 = vunpack.c.l.b16 %v878
          %v911 = vunpack.c.l.b16 %v879
          %v912 = vunpack.c.l.b16 %v880
          %v913 = vunpack.c.l.b16 %v881
          %v914 = vunpack.c.l.b16 %v882
          %v915 = vunpack.c.l.b16 %v883
          %v916 = vunpack.c.l.b16 %v884
          %v917 = vunpack.c.l.b16 %v885
          %v918 = vunpack.c.l.b16 %v886
          %v919 = vpack.c.b16 %v904, %v903
          %v920 = vpack.c.b16 %v906, %v905
          %v921 = vpack.c.b16 %v908, %v907
          %v922 = vpack.c.b16 %v910, %v909
          %v923 = vpack.c.b16 %v912, %v911
          %v924 = vpack.c.b16 %v914, %v913
          %v925 = vpack.c.b16 %v916, %v915
          %v926 = vpack.c.b16 %v918, %v917
          %935 = vmatprep.subr.bf16.mxu0 0
          %936 = vmatpush1.bf16.msra.mxu0 %v919
          %937 = vmatprep.subr.bf16.mxu0 0
          %938 = vmatpush1.bf16.msra.mxu0 %v920
          %939 = vmatprep.subr.bf16.mxu0 0
          %940 = vmatpush1.bf16.msra.mxu0 %v921
          %941 = vmatprep.subr.bf16.mxu0 0
          %942 = vmatpush1.bf16.msra.mxu0 %v922
          %943 = vmatprep.subr.bf16.mxu0 0
          %944 = vmatpush1.bf16.msra.mxu0 %v923
          %945 = vmatprep.subr.bf16.mxu0 0
          %946 = vmatpush1.bf16.msra.mxu0 %v924
          %947 = vmatprep.subr.bf16.mxu0 0
          %948 = vmatpush1.bf16.msra.mxu0 %v925
          %949 = vmatprep.subr.bf16.mxu0 0
          %950 = vmatpush1.bf16.msra.mxu0 %v926
          %951 = vmatprep.subr.bf16.mxu0 0
          %952 = vmatpush1.bf16.msra.mxu0 0
          %953 = vmatprep.subr.bf16.mxu0 0
          %954 = vmatpush1.bf16.msra.mxu0 0
          %955 = vmatprep.subr.bf16.mxu0 0
          %956 = vmatpush1.bf16.msra.mxu0 0
          %957 = vmatprep.subr.bf16.mxu0 0
          %958 = vmatpush1.bf16.msra.mxu0 0
          %959 = vmatprep.subr.bf16.mxu0 0
          %960 = vmatpush1.bf16.msra.mxu0 0
          %961 = vmatprep.subr.bf16.mxu0 0
          %962 = vmatpush1.bf16.msra.mxu0 0
          %963 = vmatprep.subr.bf16.mxu0 0
          %964 = vmatpush1.bf16.msra.mxu0 0
          %965 = vmatprep.subr.bf16.mxu0 0
          %966 = vmatpush1.bf16.msra.mxu0 0
          %967 = vmatprep.mubr.bf16.mxu0 0
          %968 = vmatmul.mubr.bf16.gmra.mrb[0].mxu0 %v860
          %v969 = vpop.f32.mrb[0].mxu0
          %v970 = vadd.f32 0.0, %v969
          %v971 = vpop.f32.mrb[0].mxu0
          %v972 = vpop.f32.mrb[0].mxu0
          %v973 = vadd.f32 0.0, %v972
          %v974 = vpop.f32.mrb[0].mxu0
          %975 = vmatprep.mubr.bf16.mxu0 0
          %976 = vmatmul.mubr.bf16.gmra.mrb[0].mxu0 %v863
          %v977 = vpop.f32.mrb[0].mxu0
          %v978 = vadd.f32 0.0, %v977
          %v979 = vpop.f32.mrb[0].mxu0
          %v980 = vpop.f32.mrb[0].mxu0
          %v981 = vadd.f32 0.0, %v980
          %v982 = vpop.f32.mrb[0].mxu0
          %983 = vmatprep.mubr.bf16.mxu0 0
          %984 = vmatmul.mubr.bf16.gmra.mrb[0].mxu0 %v866
          %v985 = vpop.f32.mrb[0].mxu0
          %v986 = vadd.f32 0.0, %v985
          %v987 = vpop.f32.mrb[0].mxu0
          %v988 = vpop.f32.mrb[0].mxu0
          %v989 = vadd.f32 0.0, %v988
          %v990 = vpop.f32.mrb[0].mxu0
          %991 = vmatprep.mubr.bf16.mxu0 0
          %992 = vmatmul.mubr.bf16.gmra.mrb[0].mxu0 %v869
          %v993 = vpop.f32.mrb[0].mxu0
          %v994 = vadd.f32 0.0, %v993
          %v995 = vpop.f32.mrb[0].mxu0
          %v996 = vpop.f32.mrb[0].mxu0
          %v997 = vadd.f32 0.0, %v996
          %v998 = vpop.f32.mrb[0].mxu0
          %999 = vdwg.mxu0
          %s1000 = smul.u32 %s23, 256
          %s1001 = scalar_lea.vmem [#allocation3], %s1000
          %vm1002 = vcmask 130048
          %1003 = vst.msk [vmem:[%s1001] sm:$0xff] %vm1002, %v970
          %1004 = vst.msk [vmem:[%s1001 + $0x8] sm:$0xff] %vm1002, %v973
          %1005 = vst.msk [vmem:[%s1001 + $0x10] sm:$0xff] %vm1002, %v978
          %1006 = vst.msk [vmem:[%s1001 + $0x18] sm:$0xff] %vm1002, %v981
          %1007 = vst.msk [vmem:[%s1001 + $0x20] sm:$0xff] %vm1002, %v986
          %1008 = vst.msk [vmem:[%s1001 + $0x28] sm:$0xff] %vm1002, %v989
          %1009 = vst.msk [vmem:[%s1001 + $0x30] sm:$0xff] %vm1002, %v994
          %1010 = vst.msk [vmem:[%s1001 + $0x38] sm:$0xff] %vm1002, %v997
          %v1011 = vsel %vm1002, %v970, 0.0
          %v1012 = vsel %vm1002, %v973, 0.0
          %v1013 = vadd.f32 %v1011, %v1012
          %v1014 = vsel %vm1002, %v978, 0.0
          %v1015 = vadd.f32 %v1013, %v1014
          %v1016 = vsel %vm1002, %v981, 0.0
          %v1017 = vadd.f32 %v1015, %v1016
          %v1018 = vsel %vm1002, %v986, 0.0
          %v1019 = vadd.f32 %v1017, %v1018
          %v1020 = vsel %vm1002, %v989, 0.0
          %v1021 = vadd.f32 %v1019, %v1020
          %v1022 = vsel %vm1002, %v994, 0.0
          %v1023 = vadd.f32 %v1021, %v1022
          %v1024 = vsel %vm1002, %v997, 0.0
          %v1025 = vadd.f32 %v1023, %v1024
          %v1026 = vrot.slane %v1025, 4
          %v1027 = vadd.f32 %v1025, %v1026
          %v1028 = vrot.slane %v1027, 2
          %v1029 = vadd.f32 %v1027, %v1028
          %v1030 = vrot.slane %v1029, 1
          %v1031 = vadd.f32 %v1029, %v1030
          %v1032 = vadd.f32 %v1031, 0.0
          %v1033 = vmul.f32 %v970, %v970
          %v1034 = vmul.f32 %v973, %v973
          %v1035 = vmul.f32 %v978, %v978
          %v1036 = vmul.f32 %v981, %v981
          %v1037 = vmul.f32 %v986, %v986
          %v1038 = vmul.f32 %v989, %v989
          %v1039 = vmul.f32 %v994, %v994
          %v1040 = vmul.f32 %v997, %v997
          %v1041 = vsel %vm1002, %v1033, 0.0
          %v1042 = vsel %vm1002, %v1034, 0.0
          %v1043 = vadd.f32 %v1041, %v1042
          %v1044 = vsel %vm1002, %v1035, 0.0
          %v1045 = vadd.f32 %v1043, %v1044
          %v1046 = vsel %vm1002, %v1036, 0.0
          %v1047 = vadd.f32 %v1045, %v1046
          %v1048 = vsel %vm1002, %v1037, 0.0
          %v1049 = vadd.f32 %v1047, %v1048
          %v1050 = vsel %vm1002, %v1038, 0.0
          %v1051 = vadd.f32 %v1049, %v1050
          %v1052 = vsel %vm1002, %v1039, 0.0
          %v1053 = vadd.f32 %v1051, %v1052
          %v1054 = vsel %vm1002, %v1040, 0.0
          %v1055 = vadd.f32 %v1053, %v1054
          %v1056 = vrot.slane %v1055, 4
          %v1057 = vadd.f32 %v1055, %v1056
          %v1058 = vrot.slane %v1057, 2
          %v1059 = vadd.f32 %v1057, %v1058
          %v1060 = vrot.slane %v1059, 1
          %v1061 = vadd.f32 %v1059, %v1060
          %v1062 = vadd.f32 %v1061, 0.0
          %v1063 = vunpack.c.l.b16 %v343
          %v1064 = vunpack.c.l.b16 %v347
          %v1065 = vunpack.c.l.b16 %v351
          %v1066 = vunpack.c.l.b16 %v355
          %v1067 = vunpack.c.l.b16 %v359
          %v1068 = vunpack.c.l.b16 %v363
          %v1069 = vunpack.c.l.b16 %v367
          %v1070 = vunpack.c.l.b16 %v371
          %v1071 = vpack.c.b16 %v1064, %v1063
          %v1072 = vpack.c.b16 %v1066, %v1065
          %v1073 = vpack.c.b16 %v1068, %v1067
          %v1074 = vpack.c.b16 %v1070, %v1069
          %1075 = vrot.lane.b32.xlu0 %v1071, 32
          %v1076 = vpop.permute.xlu0 %1075
          %1077 = vrot.lane.b32.xlu0 %v1072, 32
          %v1078 = vpop.permute.xlu0 %1077
          %1079 = vrot.lane.b32.xlu0 %v1073, 32
          %v1080 = vpop.permute.xlu0 %1079
          %1081 = vrot.lane.b32.xlu0 %v1074, 32
          %v1082 = vpop.permute.xlu0 %1081
          %1083 = vrot.lane.b32.xlu0 %v824, 64
          %v1084 = vpop.permute.xlu0 %1083
          %1085 = vrot.lane.b32.xlu0 %v825, 64
          %v1086 = vpop.permute.xlu0 %1085
          %1087 = vrot.lane.b32.xlu0 %v826, 64
          %v1088 = vpop.permute.xlu0 %1087
          %1089 = vrot.lane.b32.xlu0 %v827, 64
          %v1090 = vpop.permute.xlu0 %1089
          %v1091 = vunpack.c.l.b16 %v531
          %v1092 = vunpack.c.l.b16 %v535
          %v1093 = vunpack.c.l.b16 %v539
          %v1094 = vunpack.c.l.b16 %v543
          %v1095 = vunpack.c.l.b16 %v547
          %v1096 = vunpack.c.l.b16 %v551
          %v1097 = vunpack.c.l.b16 %v555
          %v1098 = vunpack.c.l.b16 %v559
          %v1099 = vpack.c.b16 %v1092, %v1091
          %v1100 = vpack.c.b16 %v1094, %v1093
          %v1101 = vpack.c.b16 %v1096, %v1095
          %v1102 = vpack.c.b16 %v1098, %v1097
          %1103 = vrot.lane.b32.xlu0 %v1099, 96
          %v1104 = vpop.permute.xlu0 %1103
          %1105 = vrot.lane.b32.xlu0 %v1100, 96
          %v1106 = vpop.permute.xlu0 %1105
          %1107 = vrot.lane.b32.xlu0 %v1101, 96
          %v1108 = vpop.permute.xlu0 %1107
          %1109 = vrot.lane.b32.xlu0 %v1102, 96
          %v1110 = vpop.permute.xlu0 %1109
          %v1113 = vsel %vm836, %v776, %v1076
          %v1116 = vsel %vm836, %v777, %v1078
          %v1119 = vsel %vm836, %v778, %v1080
          %v1122 = vsel %vm836, %v779, %v1082
          %v1124 = vsel %vm849, %v1113, %v1084
          %v1126 = vsel %vm849, %v1116, %v1086
          %v1128 = vsel %vm849, %v1119, %v1088
          %v1130 = vsel %vm849, %v1122, %v1090
          %v1132 = vsel %vm858, %v1124, %v1104
          %v1135 = vsel %vm858, %v1126, %v1106
          %v1138 = vsel %vm858, %v1128, %v1108
          %v1141 = vsel %vm858, %v1130, %v1110
          %s1143 = scalar_lea.vmem %s1, 64
          %v1144 = vld [vmem:[%s1143] sm:$0xf]
          %v1145 = vld [vmem:[%s1143 + $0x4] sm:$0xf]
          %v1146 = vld [vmem:[%s1143 + $0x8] sm:$0xf]
          %v1147 = vld [vmem:[%s1143 + $0xc] sm:$0xf]
          %v1148 = vld [vmem:[%s1143 + $0x10] sm:$0xf]
          %v1149 = vld [vmem:[%s1143 + $0x14] sm:$0xf]
          %v1150 = vld [vmem:[%s1143 + $0x18] sm:$0xf]
          %v1151 = vld [vmem:[%s1143 + $0x1c] sm:$0xf]
          %v1152 = vld [vmem:[%s1143 + $0x20] sm:$0xf]
          %v1153 = vld [vmem:[%s1143 + $0x24] sm:$0xf]
          %v1154 = vld [vmem:[%s1143 + $0x28] sm:$0xf]
          %v1155 = vld [vmem:[%s1143 + $0x2c] sm:$0xf]
          %v1156 = vld [vmem:[%s1143 + $0x30] sm:$0xf]
          %v1157 = vld [vmem:[%s1143 + $0x34] sm:$0xf]
          %v1158 = vld [vmem:[%s1143 + $0x38] sm:$0xf]
          %v1159 = vld [vmem:[%s1143 + $0x3c] sm:$0xf]
          %v1176 = vunpack.c.l.b16 %v1144
          %v1177 = vunpack.c.l.b16 %v1145
          %v1178 = vunpack.c.l.b16 %v1146
          %v1179 = vunpack.c.l.b16 %v1147
          %v1180 = vunpack.c.l.b16 %v1148
          %v1181 = vunpack.c.l.b16 %v1149
          %v1182 = vunpack.c.l.b16 %v1150
          %v1183 = vunpack.c.l.b16 %v1151
          %v1184 = vunpack.c.l.b16 %v1152
          %v1185 = vunpack.c.l.b16 %v1153
          %v1186 = vunpack.c.l.b16 %v1154
          %v1187 = vunpack.c.l.b16 %v1155
          %v1188 = vunpack.c.l.b16 %v1156
          %v1189 = vunpack.c.l.b16 %v1157
          %v1190 = vunpack.c.l.b16 %v1158
          %v1191 = vunpack.c.l.b16 %v1159
          %v1192 = vpack.c.b16 %v1177, %v1176
          %v1193 = vpack.c.b16 %v1179, %v1178
          %v1194 = vpack.c.b16 %v1181, %v1180
          %v1195 = vpack.c.b16 %v1183, %v1182
          %v1196 = vpack.c.b16 %v1185, %v1184
          %v1197 = vpack.c.b16 %v1187, %v1186
          %v1198 = vpack.c.b16 %v1189, %v1188
          %v1199 = vpack.c.b16 %v1191, %v1190
          %1208 = vmatprep.subr.bf16.mxu0 0
          %1209 = vmatpush1.bf16.msra.mxu0 %v1192
          %1210 = vmatprep.subr.bf16.mxu0 0
          %1211 = vmatpush1.bf16.msra.mxu0 %v1193
          %1212 = vmatprep.subr.bf16.mxu0 0
          %1213 = vmatpush1.bf16.msra.mxu0 %v1194
          %1214 = vmatprep.subr.bf16.mxu0 0
          %1215 = vmatpush1.bf16.msra.mxu0 %v1195
          %1216 = vmatprep.subr.bf16.mxu0 0
          %1217 = vmatpush1.bf16.msra.mxu0 %v1196
          %1218 = vmatprep.subr.bf16.mxu0 0
          %1219 = vmatpush1.bf16.msra.mxu0 %v1197
          %1220 = vmatprep.subr.bf16.mxu0 0
          %1221 = vmatpush1.bf16.msra.mxu0 %v1198
          %1222 = vmatprep.subr.bf16.mxu0 0
          %1223 = vmatpush1.bf16.msra.mxu0 %v1199
          %1224 = vmatprep.subr.bf16.mxu0 0
          %1225 = vmatpush1.bf16.msra.mxu0 0
          %1226 = vmatprep.subr.bf16.mxu0 0
          %1227 = vmatpush1.bf16.msra.mxu0 0
          %1228 = vmatprep.subr.bf16.mxu0 0
          %1229 = vmatpush1.bf16.msra.mxu0 0
          %1230 = vmatprep.subr.bf16.mxu0 0
          %1231 = vmatpush1.bf16.msra.mxu0 0
          %1232 = vmatprep.subr.bf16.mxu0 0
          %1233 = vmatpush1.bf16.msra.mxu0 0
          %1234 = vmatprep.subr.bf16.mxu0 0
          %1235 = vmatpush1.bf16.msra.mxu0 0
          %1236 = vmatprep.subr.bf16.mxu0 0
          %1237 = vmatpush1.bf16.msra.mxu0 0
          %1238 = vmatprep.subr.bf16.mxu0 0
          %1239 = vmatpush1.bf16.msra.mxu0 0
          %1240 = vmatprep.mubr.bf16.mxu0 0
          %1241 = vmatmul.mubr.bf16.gmra.mrb[0].mxu0 %v1132
          %v1242 = vpop.f32.mrb[0].mxu0
          %v1243 = vadd.f32 0.0, %v1242
          %v1244 = vpop.f32.mrb[0].mxu0
          %v1245 = vpop.f32.mrb[0].mxu0
          %v1246 = vadd.f32 0.0, %v1245
          %v1247 = vpop.f32.mrb[0].mxu0
          %1248 = vmatprep.mubr.bf16.mxu0 0
          %1249 = vmatmul.mubr.bf16.gmra.mrb[0].mxu0 %v1135
          %v1250 = vpop.f32.mrb[0].mxu0
          %v1251 = vadd.f32 0.0, %v1250
          %v1252 = vpop.f32.mrb[0].mxu0
          %v1253 = vpop.f32.mrb[0].mxu0
          %v1254 = vadd.f32 0.0, %v1253
          %v1255 = vpop.f32.mrb[0].mxu0
          %1256 = vmatprep.mubr.bf16.mxu0 0
          %1257 = vmatmul.mubr.bf16.gmra.mrb[0].mxu0 %v1138
          %v1258 = vpop.f32.mrb[0].mxu0
          %v1259 = vadd.f32 0.0, %v1258
          %v1260 = vpop.f32.mrb[0].mxu0
          %v1261 = vpop.f32.mrb[0].mxu0
          %v1262 = vadd.f32 0.0, %v1261
          %v1263 = vpop.f32.mrb[0].mxu0
          %1264 = vmatprep.mubr.bf16.mxu0 0
          %1265 = vmatmul.mubr.bf16.gmra.mrb[0].mxu0 %v1141
          %v1266 = vpop.f32.mrb[0].mxu0
          %v1267 = vadd.f32 0.0, %v1266
          %v1268 = vpop.f32.mrb[0].mxu0
          %v1269 = vpop.f32.mrb[0].mxu0
          %v1270 = vadd.f32 0.0, %v1269
          %v1271 = vpop.f32.mrb[0].mxu0
          %1272 = vdwg.mxu0
          %s1273 = sadd.s32 64, %s1000
          %s1274 = scalar_lea.vmem [#allocation3], %s1273
          %1275 = vst.msk [vmem:[%s1274] sm:$0xff] %vm1002, %v1243
          %1276 = vst.msk [vmem:[%s1274 + $0x8] sm:$0xff] %vm1002, %v1246
          %1277 = vst.msk [vmem:[%s1274 + $0x10] sm:$0xff] %vm1002, %v1251
          %1278 = vst.msk [vmem:[%s1274 + $0x18] sm:$0xff] %vm1002, %v1254
          %1279 = vst.msk [vmem:[%s1274 + $0x20] sm:$0xff] %vm1002, %v1259
          %1280 = vst.msk [vmem:[%s1274 + $0x28] sm:$0xff] %vm1002, %v1262
          %1281 = vst.msk [vmem:[%s1274 + $0x30] sm:$0xff] %vm1002, %v1267
          %1282 = vst.msk [vmem:[%s1274 + $0x38] sm:$0xff] %vm1002, %v1270
          %v1283 = vsel %vm1002, %v1243, 0.0
          %v1284 = vsel %vm1002, %v1246, 0.0
          %v1285 = vadd.f32 %v1283, %v1284
          %v1286 = vsel %vm1002, %v1251, 0.0
          %v1287 = vadd.f32 %v1285, %v1286
          %v1288 = vsel %vm1002, %v1254, 0.0
          %v1289 = vadd.f32 %v1287, %v1288
          %v1290 = vsel %vm1002, %v1259, 0.0
          %v1291 = vadd.f32 %v1289, %v1290
          %v1292 = vsel %vm1002, %v1262, 0.0
          %v1293 = vadd.f32 %v1291, %v1292
          %v1294 = vsel %vm1002, %v1267, 0.0
          %v1295 = vadd.f32 %v1293, %v1294
          %v1296 = vsel %vm1002, %v1270, 0.0
          %v1297 = vadd.f32 %v1295, %v1296
          %v1298 = vrot.slane %v1297, 4
          %v1299 = vadd.f32 %v1297, %v1298
          %v1300 = vrot.slane %v1299, 2
          %v1301 = vadd.f32 %v1299, %v1300
          %v1302 = vrot.slane %v1301, 1
          %v1303 = vadd.f32 %v1301, %v1302
          %v1304 = vadd.f32 %v1032, %v1303
          %v1305 = vmul.f32 %v1243, %v1243
          %v1306 = vmul.f32 %v1246, %v1246
          %v1307 = vmul.f32 %v1251, %v1251
          %v1308 = vmul.f32 %v1254, %v1254
          %v1309 = vmul.f32 %v1259, %v1259
          %v1310 = vmul.f32 %v1262, %v1262
          %v1311 = vmul.f32 %v1267, %v1267
          %v1312 = vmul.f32 %v1270, %v1270
          %v1313 = vsel %vm1002, %v1305, 0.0
          %v1314 = vsel %vm1002, %v1306, 0.0
          %v1315 = vadd.f32 %v1313, %v1314
          %v1316 = vsel %vm1002, %v1307, 0.0
          %v1317 = vadd.f32 %v1315, %v1316
          %v1318 = vsel %vm1002, %v1308, 0.0
          %v1319 = vadd.f32 %v1317, %v1318
          %v1320 = vsel %vm1002, %v1309, 0.0
          %v1321 = vadd.f32 %v1319, %v1320
          %v1322 = vsel %vm1002, %v1310, 0.0
          %v1323 = vadd.f32 %v1321, %v1322
          %v1324 = vsel %vm1002, %v1311, 0.0
          %v1325 = vadd.f32 %v1323, %v1324
          %v1326 = vsel %vm1002, %v1312, 0.0
          %v1327 = vadd.f32 %v1325, %v1326
          %v1328 = vrot.slane %v1327, 4
          %v1329 = vadd.f32 %v1327, %v1328
          %v1330 = vrot.slane %v1329, 2
          %v1331 = vadd.f32 %v1329, %v1330
          %v1332 = vrot.slane %v1331, 1
          %v1333 = vadd.f32 %v1331, %v1332
          %v1334 = vadd.f32 %v1062, %v1333
          %1335 = vrot.lane.b32.xlu0 %v824, 32
          %v1336 = vpop.permute.xlu0 %1335
          %1337 = vrot.lane.b32.xlu0 %v825, 32
          %v1338 = vpop.permute.xlu0 %1337
          %1339 = vrot.lane.b32.xlu0 %v826, 32
          %v1340 = vpop.permute.xlu0 %1339
          %1341 = vrot.lane.b32.xlu0 %v827, 32
          %v1342 = vpop.permute.xlu0 %1341
          %v1351 = vunpack.c.l.b16 %v564
          %v1352 = vunpack.c.l.b16 %v565
          %v1353 = vunpack.c.l.b16 %v566
          %v1354 = vunpack.c.l.b16 %v567
          %v1355 = vunpack.c.l.b16 %v568
          %v1356 = vunpack.c.l.b16 %v569
          %v1357 = vunpack.c.l.b16 %v570
          %v1358 = vunpack.c.l.b16 %v571
          %v1359 = vpack.c.b16 %v1352, %v1351
          %v1360 = vpack.c.b16 %v1354, %v1353
          %v1361 = vpack.c.b16 %v1356, %v1355
          %v1362 = vpack.c.b16 %v1358, %v1357
          %1363 = vrot.lane.b32.xlu0 %v1359, 64
          %v1364 = vpop.permute.xlu0 %1363
          %1365 = vrot.lane.b32.xlu0 %v1360, 64
          %v1366 = vpop.permute.xlu0 %1365
          %1367 = vrot.lane.b32.xlu0 %v1361, 64
          %v1368 = vpop.permute.xlu0 %1367
          %1369 = vrot.lane.b32.xlu0 %v1362, 64
          %v1370 = vpop.permute.xlu0 %1369
          %v1371 = vunpack.c.l.b16 %v593
          %v1372 = vunpack.c.l.b16 %v607
          %v1373 = vunpack.c.l.b16 %v621
          %v1374 = vunpack.c.l.b16 %v635
          %v1375 = vunpack.c.l.b16 %v649
          %v1376 = vunpack.c.l.b16 %v663
          %v1377 = vunpack.c.l.b16 %v677
          %v1378 = vunpack.c.l.b16 %v691
          %v1379 = vpack.c.b16 %v1372, %v1371
          %v1380 = vpack.c.b16 %v1374, %v1373
          %v1381 = vpack.c.b16 %v1376, %v1375
          %v1382 = vpack.c.b16 %v1378, %v1377
          %1383 = vrot.lane.b32.xlu0 %v1379, 96
          %v1384 = vpop.permute.xlu0 %1383
          %1385 = vrot.lane.b32.xlu0 %v1380, 96
          %v1386 = vpop.permute.xlu0 %1385
          %1387 = vrot.lane.b32.xlu0 %v1381, 96
          %v1388 = vpop.permute.xlu0 %1387
          %1389 = vrot.lane.b32.xlu0 %v1382, 96
          %v1390 = vpop.permute.xlu0 %1389
          %v1393 = vsel %vm836, %v804, %v1336
          %v1396 = vsel %vm836, %v805, %v1338
          %v1399 = vsel %vm836, %v806, %v1340
          %v1402 = vsel %vm836, %v807, %v1342
          %v1404 = vsel %vm849, %v1393, %v1364
          %v1406 = vsel %vm849, %v1396, %v1366
          %v1408 = vsel %vm849, %v1399, %v1368
          %v1410 = vsel %vm849, %v1402, %v1370
          %v1412 = vsel %vm858, %v1404, %v1384
          %v1415 = vsel %vm858, %v1406, %v1386
          %v1418 = vsel %vm858, %v1408, %v1388
          %v1421 = vsel %vm858, %v1410, %v1390
          %s1423 = scalar_lea.vmem %s1, 128
          %v1424 = vld [vmem:[%s1423] sm:$0xf]
          %v1425 = vld [vmem:[%s1423 + $0x4] sm:$0xf]
          %v1426 = vld [vmem:[%s1423 + $0x8] sm:$0xf]
          %v1427 = vld [vmem:[%s1423 + $0xc] sm:$0xf]
          %v1428 = vld [vmem:[%s1423 + $0x10] sm:$0xf]
          %v1429 = vld [vmem:[%s1423 + $0x14] sm:$0xf]
          %v1430 = vld [vmem:[%s1423 + $0x18] sm:$0xf]
          %v1431 = vld [vmem:[%s1423 + $0x1c] sm:$0xf]
          %v1432 = vld [vmem:[%s1423 + $0x20] sm:$0xf]
          %v1433 = vld [vmem:[%s1423 + $0x24] sm:$0xf]
          %v1434 = vld [vmem:[%s1423 + $0x28] sm:$0xf]
          %v1435 = vld [vmem:[%s1423 + $0x2c] sm:$0xf]
          %v1436 = vld [vmem:[%s1423 + $0x30] sm:$0xf]
          %v1437 = vld [vmem:[%s1423 + $0x34] sm:$0xf]
          %v1438 = vld [vmem:[%s1423 + $0x38] sm:$0xf]
          %v1439 = vld [vmem:[%s1423 + $0x3c] sm:$0xf]
          %v1456 = vunpack.c.l.b16 %v1424
          %v1457 = vunpack.c.l.b16 %v1425
          %v1458 = vunpack.c.l.b16 %v1426
          %v1459 = vunpack.c.l.b16 %v1427
          %v1460 = vunpack.c.l.b16 %v1428
          %v1461 = vunpack.c.l.b16 %v1429
          %v1462 = vunpack.c.l.b16 %v1430
          %v1463 = vunpack.c.l.b16 %v1431
          %v1464 = vunpack.c.l.b16 %v1432
          %v1465 = vunpack.c.l.b16 %v1433
          %v1466 = vunpack.c.l.b16 %v1434
          %v1467 = vunpack.c.l.b16 %v1435
          %v1468 = vunpack.c.l.b16 %v1436
          %v1469 = vunpack.c.l.b16 %v1437
          %v1470 = vunpack.c.l.b16 %v1438
          %v1471 = vunpack.c.l.b16 %v1439
          %v1472 = vpack.c.b16 %v1457, %v1456
          %v1473 = vpack.c.b16 %v1459, %v1458
          %v1474 = vpack.c.b16 %v1461, %v1460
          %v1475 = vpack.c.b16 %v1463, %v1462
          %v1476 = vpack.c.b16 %v1465, %v1464
          %v1477 = vpack.c.b16 %v1467, %v1466
          %v1478 = vpack.c.b16 %v1469, %v1468
          %v1479 = vpack.c.b16 %v1471, %v1470
          %1488 = vmatprep.subr.bf16.mxu0 0
          %1489 = vmatpush1.bf16.msra.mxu0 %v1472
          %1490 = vmatprep.subr.bf16.mxu0 0
          %1491 = vmatpush1.bf16.msra.mxu0 %v1473
          %1492 = vmatprep.subr.bf16.mxu0 0
          %1493 = vmatpush1.bf16.msra.mxu0 %v1474
          %1494 = vmatprep.subr.bf16.mxu0 0
          %1495 = vmatpush1.bf16.msra.mxu0 %v1475
          %1496 = vmatprep.subr.bf16.mxu0 0
          %1497 = vmatpush1.bf16.msra.mxu0 %v1476
          %1498 = vmatprep.subr.bf16.mxu0 0
          %1499 = vmatpush1.bf16.msra.mxu0 %v1477
          %1500 = vmatprep.subr.bf16.mxu0 0
          %1501 = vmatpush1.bf16.msra.mxu0 %v1478
          %1502 = vmatprep.subr.bf16.mxu0 0
          %1503 = vmatpush1.bf16.msra.mxu0 %v1479
          %1504 = vmatprep.subr.bf16.mxu0 0
          %1505 = vmatpush1.bf16.msra.mxu0 0
          %1506 = vmatprep.subr.bf16.mxu0 0
          %1507 = vmatpush1.bf16.msra.mxu0 0
          %1508 = vmatprep.subr.bf16.mxu0 0
          %1509 = vmatpush1.bf16.msra.mxu0 0
          %1510 = vmatprep.subr.bf16.mxu0 0
          %1511 = vmatpush1.bf16.msra.mxu0 0
          %1512 = vmatprep.subr.bf16.mxu0 0
          %1513 = vmatpush1.bf16.msra.mxu0 0
          %1514 = vmatprep.subr.bf16.mxu0 0
          %1515 = vmatpush1.bf16.msra.mxu0 0
          %1516 = vmatprep.subr.bf16.mxu0 0
          %1517 = vmatpush1.bf16.msra.mxu0 0
          %1518 = vmatprep.subr.bf16.mxu0 0
          %1519 = vmatpush1.bf16.msra.mxu0 0
          %1520 = vmatprep.mubr.bf16.mxu0 0
          %1521 = vmatmul.mubr.bf16.gmra.mrb[0].mxu0 %v1412
          %v1522 = vpop.f32.mrb[0].mxu0
          %v1523 = vadd.f32 0.0, %v1522
          %v1524 = vpop.f32.mrb[0].mxu0
          %v1525 = vpop.f32.mrb[0].mxu0
          %v1526 = vadd.f32 0.0, %v1525
          %v1527 = vpop.f32.mrb[0].mxu0
          %1528 = vmatprep.mubr.bf16.mxu0 0
          %1529 = vmatmul.mubr.bf16.gmra.mrb[0].mxu0 %v1415
          %v1530 = vpop.f32.mrb[0].mxu0
          %v1531 = vadd.f32 0.0, %v1530
          %v1532 = vpop.f32.mrb[0].mxu0
          %v1533 = vpop.f32.mrb[0].mxu0
          %v1534 = vadd.f32 0.0, %v1533
          %v1535 = vpop.f32.mrb[0].mxu0
          %1536 = vmatprep.mubr.bf16.mxu0 0
          %1537 = vmatmul.mubr.bf16.gmra.mrb[0].mxu0 %v1418
          %v1538 = vpop.f32.mrb[0].mxu0
          %v1539 = vadd.f32 0.0, %v1538
          %v1540 = vpop.f32.mrb[0].mxu0
          %v1541 = vpop.f32.mrb[0].mxu0
          %v1542 = vadd.f32 0.0, %v1541
          %v1543 = vpop.f32.mrb[0].mxu0
          %1544 = vmatprep.mubr.bf16.mxu0 0
          %1545 = vmatmul.mubr.bf16.gmra.mrb[0].mxu0 %v1421
          %v1546 = vpop.f32.mrb[0].mxu0
          %v1547 = vadd.f32 0.0, %v1546
          %v1548 = vpop.f32.mrb[0].mxu0
          %v1549 = vpop.f32.mrb[0].mxu0
          %v1550 = vadd.f32 0.0, %v1549
          %v1551 = vpop.f32.mrb[0].mxu0
          %1552 = vdwg.mxu0
          %s1553 = sadd.s32 128, %s1000
          %s1554 = scalar_lea.vmem [#allocation3], %s1553
          %1555 = vst.msk [vmem:[%s1554] sm:$0xff] %vm1002, %v1523
          %1556 = vst.msk [vmem:[%s1554 + $0x8] sm:$0xff] %vm1002, %v1526
          %1557 = vst.msk [vmem:[%s1554 + $0x10] sm:$0xff] %vm1002, %v1531
          %1558 = vst.msk [vmem:[%s1554 + $0x18] sm:$0xff] %vm1002, %v1534
          %1559 = vst.msk [vmem:[%s1554 + $0x20] sm:$0xff] %vm1002, %v1539
          %1560 = vst.msk [vmem:[%s1554 + $0x28] sm:$0xff] %vm1002, %v1542
          %1561 = vst.msk [vmem:[%s1554 + $0x30] sm:$0xff] %vm1002, %v1547
          %1562 = vst.msk [vmem:[%s1554 + $0x38] sm:$0xff] %vm1002, %v1550
          %v1563 = vsel %vm1002, %v1523, 0.0
          %v1564 = vsel %vm1002, %v1526, 0.0
          %v1565 = vadd.f32 %v1563, %v1564
          %v1566 = vsel %vm1002, %v1531, 0.0
          %v1567 = vadd.f32 %v1565, %v1566
          %v1568 = vsel %vm1002, %v1534, 0.0
          %v1569 = vadd.f32 %v1567, %v1568
          %v1570 = vsel %vm1002, %v1539, 0.0
          %v1571 = vadd.f32 %v1569, %v1570
          %v1572 = vsel %vm1002, %v1542, 0.0
          %v1573 = vadd.f32 %v1571, %v1572
          %v1574 = vsel %vm1002, %v1547, 0.0
          %v1575 = vadd.f32 %v1573, %v1574
          %v1576 = vsel %vm1002, %v1550, 0.0
          %v1577 = vadd.f32 %v1575, %v1576
          %v1578 = vrot.slane %v1577, 4
          %v1579 = vadd.f32 %v1577, %v1578
          %v1580 = vrot.slane %v1579, 2
          %v1581 = vadd.f32 %v1579, %v1580
          %v1582 = vrot.slane %v1581, 1
          %v1583 = vadd.f32 %v1581, %v1582
          %v1584 = vadd.f32 %v1304, %v1583
          %v1585 = vmul.f32 %v1523, %v1523
          %v1586 = vmul.f32 %v1526, %v1526
          %v1587 = vmul.f32 %v1531, %v1531
          %v1588 = vmul.f32 %v1534, %v1534
          %v1589 = vmul.f32 %v1539, %v1539
          %v1590 = vmul.f32 %v1542, %v1542
          %v1591 = vmul.f32 %v1547, %v1547
          %v1592 = vmul.f32 %v1550, %v1550
          %v1593 = vsel %vm1002, %v1585, 0.0
          %v1594 = vsel %vm1002, %v1586, 0.0
          %v1595 = vadd.f32 %v1593, %v1594
          %v1596 = vsel %vm1002, %v1587, 0.0
          %v1597 = vadd.f32 %v1595, %v1596
          %v1598 = vsel %vm1002, %v1588, 0.0
          %v1599 = vadd.f32 %v1597, %v1598
          %v1600 = vsel %vm1002, %v1589, 0.0
          %v1601 = vadd.f32 %v1599, %v1600
          %v1602 = vsel %vm1002, %v1590, 0.0
          %v1603 = vadd.f32 %v1601, %v1602
          %v1604 = vsel %vm1002, %v1591, 0.0
          %v1605 = vadd.f32 %v1603, %v1604
          %v1606 = vsel %vm1002, %v1592, 0.0
          %v1607 = vadd.f32 %v1605, %v1606
          %v1608 = vrot.slane %v1607, 4
          %v1609 = vadd.f32 %v1607, %v1608
          %v1610 = vrot.slane %v1609, 2
          %v1611 = vadd.f32 %v1609, %v1610
          %v1612 = vrot.slane %v1611, 1
          %v1613 = vadd.f32 %v1611, %v1612
          %v1614 = vadd.f32 %v1334, %v1613
          %1615 = vrot.lane.b32.xlu0 %v1099, 32
          %v1616 = vpop.permute.xlu0 %1615
          %1617 = vrot.lane.b32.xlu0 %v1100, 32
          %v1618 = vpop.permute.xlu0 %1617
          %1619 = vrot.lane.b32.xlu0 %v1101, 32
          %v1620 = vpop.permute.xlu0 %1619
          %1621 = vrot.lane.b32.xlu0 %v1102, 32
          %v1622 = vpop.permute.xlu0 %1621
          %1623 = vrot.lane.b32.xlu0 %v1379, 64
          %v1624 = vpop.permute.xlu0 %1623
          %1625 = vrot.lane.b32.xlu0 %v1380, 64
          %v1626 = vpop.permute.xlu0 %1625
          %1627 = vrot.lane.b32.xlu0 %v1381, 64
          %v1628 = vpop.permute.xlu0 %1627
          %1629 = vrot.lane.b32.xlu0 %v1382, 64
          %v1630 = vpop.permute.xlu0 %1629
          %v1631 = vunpack.c.l.b16 %v719
          %v1632 = vunpack.c.l.b16 %v723
          %v1633 = vunpack.c.l.b16 %v727
          %v1634 = vunpack.c.l.b16 %v731
          %v1635 = vunpack.c.l.b16 %v735
          %v1636 = vunpack.c.l.b16 %v739
          %v1637 = vunpack.c.l.b16 %v743
          %v1638 = vunpack.c.l.b16 %v747
          %v1639 = vpack.c.b16 %v1632, %v1631
          %v1640 = vpack.c.b16 %v1634, %v1633
          %v1641 = vpack.c.b16 %v1636, %v1635
          %v1642 = vpack.c.b16 %v1638, %v1637
          %1643 = vrot.lane.b32.xlu0 %v1639, 96
          %v1644 = vpop.permute.xlu0 %1643
          %1645 = vrot.lane.b32.xlu0 %v1640, 96
          %v1646 = vpop.permute.xlu0 %1645
          %1647 = vrot.lane.b32.xlu0 %v1641, 96
          %v1648 = vpop.permute.xlu0 %1647
          %1649 = vrot.lane.b32.xlu0 %v1642, 96
          %v1650 = vpop.permute.xlu0 %1649
          %v1653 = vsel %vm836, %v824, %v1616
          %v1656 = vsel %vm836, %v825, %v1618
          %v1659 = vsel %vm836, %v826, %v1620
          %v1662 = vsel %vm836, %v827, %v1622
          %v1664 = vsel %vm849, %v1653, %v1624
          %v1666 = vsel %vm849, %v1656, %v1626
          %v1668 = vsel %vm849, %v1659, %v1628
          %v1670 = vsel %vm849, %v1662, %v1630
          %v1672 = vsel %vm858, %v1664, %v1644
          %v1675 = vsel %vm858, %v1666, %v1646
          %v1678 = vsel %vm858, %v1668, %v1648
          %v1681 = vsel %vm858, %v1670, %v1650
          %s1683 = scalar_lea.vmem %s1, 192
          %v1684 = vld [vmem:[%s1683] sm:$0xf]
          %v1685 = vld [vmem:[%s1683 + $0x4] sm:$0xf]
          %v1686 = vld [vmem:[%s1683 + $0x8] sm:$0xf]
          %v1687 = vld [vmem:[%s1683 + $0xc] sm:$0xf]
          %v1688 = vld [vmem:[%s1683 + $0x10] sm:$0xf]
          %v1689 = vld [vmem:[%s1683 + $0x14] sm:$0xf]
          %v1690 = vld [vmem:[%s1683 + $0x18] sm:$0xf]
          %v1691 = vld [vmem:[%s1683 + $0x1c] sm:$0xf]
          %v1692 = vld [vmem:[%s1683 + $0x20] sm:$0xf]
          %v1693 = vld [vmem:[%s1683 + $0x24] sm:$0xf]
          %v1694 = vld [vmem:[%s1683 + $0x28] sm:$0xf]
          %v1695 = vld [vmem:[%s1683 + $0x2c] sm:$0xf]
          %v1696 = vld [vmem:[%s1683 + $0x30] sm:$0xf]
          %v1697 = vld [vmem:[%s1683 + $0x34] sm:$0xf]
          %v1698 = vld [vmem:[%s1683 + $0x38] sm:$0xf]
          %v1699 = vld [vmem:[%s1683 + $0x3c] sm:$0xf]
          %v1716 = vunpack.c.l.b16 %v1684
          %v1717 = vunpack.c.l.b16 %v1685
          %v1718 = vunpack.c.l.b16 %v1686
          %v1719 = vunpack.c.l.b16 %v1687
          %v1720 = vunpack.c.l.b16 %v1688
          %v1721 = vunpack.c.l.b16 %v1689
          %v1722 = vunpack.c.l.b16 %v1690
          %v1723 = vunpack.c.l.b16 %v1691
          %v1724 = vunpack.c.l.b16 %v1692
          %v1725 = vunpack.c.l.b16 %v1693
          %v1726 = vunpack.c.l.b16 %v1694
          %v1727 = vunpack.c.l.b16 %v1695
          %v1728 = vunpack.c.l.b16 %v1696
          %v1729 = vunpack.c.l.b16 %v1697
          %v1730 = vunpack.c.l.b16 %v1698
          %v1731 = vunpack.c.l.b16 %v1699
          %v1732 = vpack.c.b16 %v1717, %v1716
          %v1733 = vpack.c.b16 %v1719, %v1718
          %v1734 = vpack.c.b16 %v1721, %v1720
          %v1735 = vpack.c.b16 %v1723, %v1722
          %v1736 = vpack.c.b16 %v1725, %v1724
          %v1737 = vpack.c.b16 %v1727, %v1726
          %v1738 = vpack.c.b16 %v1729, %v1728
          %v1739 = vpack.c.b16 %v1731, %v1730
          %1748 = vmatprep.subr.bf16.mxu0 0
          %1749 = vmatpush1.bf16.msra.mxu0 %v1732
          %1750 = vmatprep.subr.bf16.mxu0 0
          %1751 = vmatpush1.bf16.msra.mxu0 %v1733
          %1752 = vmatprep.subr.bf16.mxu0 0
          %1753 = vmatpush1.bf16.msra.mxu0 %v1734
          %1754 = vmatprep.subr.bf16.mxu0 0
          %1755 = vmatpush1.bf16.msra.mxu0 %v1735
          %1756 = vmatprep.subr.bf16.mxu0 0
          %1757 = vmatpush1.bf16.msra.mxu0 %v1736
          %1758 = vmatprep.subr.bf16.mxu0 0
          %1759 = vmatpush1.bf16.msra.mxu0 %v1737
          %1760 = vmatprep.subr.bf16.mxu0 0
          %1761 = vmatpush1.bf16.msra.mxu0 %v1738
          %1762 = vmatprep.subr.bf16.mxu0 0
          %1763 = vmatpush1.bf16.msra.mxu0 %v1739
          %1764 = vmatprep.subr.bf16.mxu0 0
          %1765 = vmatpush1.bf16.msra.mxu0 0
          %1766 = vmatprep.subr.bf16.mxu0 0
          %1767 = vmatpush1.bf16.msra.mxu0 0
          %1768 = vmatprep.subr.bf16.mxu0 0
          %1769 = vmatpush1.bf16.msra.mxu0 0
          %1770 = vmatprep.subr.bf16.mxu0 0
          %1771 = vmatpush1.bf16.msra.mxu0 0
          %1772 = vmatprep.subr.bf16.mxu0 0
          %1773 = vmatpush1.bf16.msra.mxu0 0
          %1774 = vmatprep.subr.bf16.mxu0 0
          %1775 = vmatpush1.bf16.msra.mxu0 0
          %1776 = vmatprep.subr.bf16.mxu0 0
          %1777 = vmatpush1.bf16.msra.mxu0 0
          %1778 = vmatprep.subr.bf16.mxu0 0
          %1779 = vmatpush1.bf16.msra.mxu0 0
          %1780 = vmatprep.mubr.bf16.mxu0 0
          %1781 = vmatmul.mubr.bf16.gmra.mrb[0].mxu0 %v1672
          %v1782 = vpop.f32.mrb[0].mxu0
          %v1783 = vadd.f32 0.0, %v1782
          %v1784 = vpop.f32.mrb[0].mxu0
          %v1785 = vpop.f32.mrb[0].mxu0
          %v1786 = vadd.f32 0.0, %v1785
          %v1787 = vpop.f32.mrb[0].mxu0
          %1788 = vmatprep.mubr.bf16.mxu0 0
          %1789 = vmatmul.mubr.bf16.gmra.mrb[0].mxu0 %v1675
          %v1790 = vpop.f32.mrb[0].mxu0
          %v1791 = vadd.f32 0.0, %v1790
          %v1792 = vpop.f32.mrb[0].mxu0
          %v1793 = vpop.f32.mrb[0].mxu0
          %v1794 = vadd.f32 0.0, %v1793
          %v1795 = vpop.f32.mrb[0].mxu0
          %1796 = vmatprep.mubr.bf16.mxu0 0
          %1797 = vmatmul.mubr.bf16.gmra.mrb[0].mxu0 %v1678
          %v1798 = vpop.f32.mrb[0].mxu0
          %v1799 = vadd.f32 0.0, %v1798
          %v1800 = vpop.f32.mrb[0].mxu0
          %v1801 = vpop.f32.mrb[0].mxu0
          %v1802 = vadd.f32 0.0, %v1801
          %v1803 = vpop.f32.mrb[0].mxu0
          %1804 = vmatprep.mubr.bf16.mxu0 0
          %1805 = vmatmul.mubr.bf16.gmra.mrb[0].mxu0 %v1681
          %v1806 = vpop.f32.mrb[0].mxu0
          %v1807 = vadd.f32 0.0, %v1806
          %v1808 = vpop.f32.mrb[0].mxu0
          %v1809 = vpop.f32.mrb[0].mxu0
          %v1810 = vadd.f32 0.0, %v1809
          %v1811 = vpop.f32.mrb[0].mxu0
          %1812 = vdwg.mxu0
          %s1813 = sadd.s32 192, %s1000
          %s1814 = scalar_lea.vmem [#allocation3], %s1813
          %1815 = vst.msk [vmem:[%s1814] sm:$0xff] %vm1002, %v1783
          %1816 = vst.msk [vmem:[%s1814 + $0x8] sm:$0xff] %vm1002, %v1786
          %1817 = vst.msk [vmem:[%s1814 + $0x10] sm:$0xff] %vm1002, %v1791
          %1818 = vst.msk [vmem:[%s1814 + $0x18] sm:$0xff] %vm1002, %v1794
          %1819 = vst.msk [vmem:[%s1814 + $0x20] sm:$0xff] %vm1002, %v1799
          %1820 = vst.msk [vmem:[%s1814 + $0x28] sm:$0xff] %vm1002, %v1802
          %1821 = vst.msk [vmem:[%s1814 + $0x30] sm:$0xff] %vm1002, %v1807
          %1822 = vst.msk [vmem:[%s1814 + $0x38] sm:$0xff] %vm1002, %v1810
          %v1823 = vsel %vm1002, %v1783, 0.0
          %v1824 = vsel %vm1002, %v1786, 0.0
          %v1825 = vadd.f32 %v1823, %v1824
          %v1826 = vsel %vm1002, %v1791, 0.0
          %v1827 = vadd.f32 %v1825, %v1826
          %v1828 = vsel %vm1002, %v1794, 0.0
          %v1829 = vadd.f32 %v1827, %v1828
          %v1830 = vsel %vm1002, %v1799, 0.0
          %v1831 = vadd.f32 %v1829, %v1830
          %v1832 = vsel %vm1002, %v1802, 0.0
          %v1833 = vadd.f32 %v1831, %v1832
          %v1834 = vsel %vm1002, %v1807, 0.0
          %v1835 = vadd.f32 %v1833, %v1834
          %v1836 = vsel %vm1002, %v1810, 0.0
          %v1837 = vadd.f32 %v1835, %v1836
          %v1838 = vrot.slane %v1837, 4
          %v1839 = vadd.f32 %v1837, %v1838
          %v1840 = vrot.slane %v1839, 2
          %v1841 = vadd.f32 %v1839, %v1840
          %v1842 = vrot.slane %v1841, 1
          %v1843 = vadd.f32 %v1841, %v1842
          %v1844 = vadd.f32 %v1584, %v1843
          %v1845 = vmul.f32 %v1783, %v1783
          %v1846 = vmul.f32 %v1786, %v1786
          %v1847 = vmul.f32 %v1791, %v1791
          %v1848 = vmul.f32 %v1794, %v1794
          %v1849 = vmul.f32 %v1799, %v1799
          %v1850 = vmul.f32 %v1802, %v1802
          %v1851 = vmul.f32 %v1807, %v1807
          %v1852 = vmul.f32 %v1810, %v1810
          %v1853 = vsel %vm1002, %v1845, 0.0
          %v1854 = vsel %vm1002, %v1846, 0.0
          %v1855 = vadd.f32 %v1853, %v1854
          %v1856 = vsel %vm1002, %v1847, 0.0
          %v1857 = vadd.f32 %v1855, %v1856
          %v1858 = vsel %vm1002, %v1848, 0.0
          %v1859 = vadd.f32 %v1857, %v1858
          %v1860 = vsel %vm1002, %v1849, 0.0
          %v1861 = vadd.f32 %v1859, %v1860
          %v1862 = vsel %vm1002, %v1850, 0.0
          %v1863 = vadd.f32 %v1861, %v1862
          %v1864 = vsel %vm1002, %v1851, 0.0
          %v1865 = vadd.f32 %v1863, %v1864
          %v1866 = vsel %vm1002, %v1852, 0.0
          %v1867 = vadd.f32 %v1865, %v1866
          %v1868 = vrot.slane %v1867, 4
          %v1869 = vadd.f32 %v1867, %v1868
          %v1870 = vrot.slane %v1869, 2
          %v1871 = vadd.f32 %v1869, %v1870
          %v1872 = vrot.slane %v1871, 1
          %v1873 = vadd.f32 %v1871, %v1872
          %v1874 = vadd.f32 %v1614, %v1873
          %v1875 = vld [vmem:[#allocation2] sm:$0x3]
          %vm1876 = vcmask 1040384
          %v1877 = vsel %vm1876, %v1844, %v1874
          %v1878 = vadd.f32 %v1875, %v1877
          %vm1879 = vcmask 123904
          %1880 = vst.msk [vmem:[#allocation2] sm:$0x3] %vm1879, %v1878
        $region36: #{tpu_custom_call.1} parent=27 // pred_fallthru
          _
        %p1881 = scmp.eq.s32.totalorder %s22, 1
        // Predicated region
        $region37: #{tpu_custom_call.1} parent=27 // pred_check
          %p1882 = pneg %p1881
        $region38: #{tpu_custom_call.1} parent=27 // pred_check_branch
          %1884 = sbr.rel (%p1882) target = $region40
        $region39: #{tpu_custom_call.1} parent=27 // pred_region
          %v1885 = vld [vmem:[#allocation2] sm:$0x1]
          %v1886 = vmul.f32 %v1885, 0.00390625
          %v1887 = vld [vmem:[#allocation2 + $0x1] sm:$0x1]
          %v1888 = vmul.f32 %v1887, 0.00390625
          %v1889 = vmul.f32 %v1886, %v1886
          %v1890 = vsub.f32 %v1888, %v1889
          %v1891 = vmax.f32 %v1890, 0.0
          %v1892 = vadd.f32 %v1891, 1e-05
          %v1893 = vrsqrt.pop %v1892
          %s1894 = smul.u32 %s23, 256
          %s1895 = scalar_lea.vmem [#allocation3], %s1894
          %v1896 = vld [vmem:[%s1895] sm:$0xff]
          %v1897 = vld [vmem:[%s1895 + $0x8] sm:$0xff]
          %v1898 = vld [vmem:[%s1895 + $0x10] sm:$0xff]
          %v1899 = vld [vmem:[%s1895 + $0x18] sm:$0xff]
          %v1900 = vld [vmem:[%s1895 + $0x20] sm:$0xff]
          %v1901 = vld [vmem:[%s1895 + $0x28] sm:$0xff]
          %v1902 = vld [vmem:[%s1895 + $0x30] sm:$0xff]
          %v1903 = vld [vmem:[%s1895 + $0x38] sm:$0xff]
          %v1904 = vlaneseq
          %v1905 = vshrl.u32 %v1904, 7
          %v1906 = vsub.s32 0, %v1905
          %v1907 = vrot.slane %v1886, %v1906
          %v1908 = vsub.f32 %v1896, %v1907
          %v1909 = vsub.f32 %v1897, %v1907
          %v1910 = vsub.f32 %v1898, %v1907
          %v1911 = vsub.f32 %v1899, %v1907
          %v1912 = vsub.f32 %v1900, %v1907
          %v1913 = vsub.f32 %v1901, %v1907
          %v1914 = vsub.f32 %v1902, %v1907
          %v1915 = vsub.f32 %v1903, %v1907
          %v1916 = vlaneseq
          %v1917 = vshrl.u32 %v1916, 7
          %v1918 = vsub.s32 0, %v1917
          %v1919 = vrot.slane %v1893, %v1918
          %v1920 = vmul.f32 %v1908, %v1919
          %v1921 = vmul.f32 %v1909, %v1919
          %v1922 = vmul.f32 %v1910, %v1919
          %v1923 = vmul.f32 %v1911, %v1919
          %v1924 = vmul.f32 %v1912, %v1919
          %v1925 = vmul.f32 %v1913, %v1919
          %v1926 = vmul.f32 %v1914, %v1919
          %v1927 = vmul.f32 %v1915, %v1919
          %v1928 = vmax.f32 %v1920, 0.0
          %v1929 = vmax.f32 %v1921, 0.0
          %v1930 = vmax.f32 %v1922, 0.0
          %v1931 = vmax.f32 %v1923, 0.0
          %v1932 = vmax.f32 %v1924, 0.0
          %v1933 = vmax.f32 %v1925, 0.0
          %v1934 = vmax.f32 %v1926, 0.0
          %v1935 = vmax.f32 %v1927, 0.0
          %v1944 = vrot.slane %v1929, 7
          %vm1945 = vcmask 1041409
          %v1946 = vsel %vm1945, %v1944, %v1928
          %v1947 = vrot.slane %v1930, 6
          %vm1948 = vcmask 1042434
          %v1949 = vsel %vm1948, %v1947, %v1946
          %v1950 = vrot.slane %v1931, 5
          %vm1951 = vcmask 1043459
          %v1952 = vsel %vm1951, %v1950, %v1949
          %v1953 = vrot.slane %v1932, 4
          %vm1954 = vcmask 1044484
          %v1955 = vsel %vm1954, %v1953, %v1952
          %v1956 = vrot.slane %v1933, 3
          %vm1957 = vcmask 1045509
          %v1958 = vsel %vm1957, %v1956, %v1955
          %v1959 = vrot.slane %v1934, 2
          %vm1960 = vcmask 1046534
          %v1961 = vsel %vm1960, %v1959, %v1958
          %v1962 = vrot.slane %v1935, 1
          %vm1963 = vcmask 1047559
          %v1964 = vsel %vm1963, %v1962, %v1961
          %v1966 = vrot.slane %v1928, 1
          %v1967 = vsel %vm1945, %v1929, %v1966
          %v1968 = vrot.slane %v1930, 7
          %v1969 = vsel %vm1948, %v1968, %v1967
          %v1970 = vrot.slane %v1931, 6
          %v1971 = vsel %vm1951, %v1970, %v1969
          %v1972 = vrot.slane %v1932, 5
          %v1973 = vsel %vm1954, %v1972, %v1971
          %v1974 = vrot.slane %v1933, 4
          %v1975 = vsel %vm1957, %v1974, %v1973
          %v1976 = vrot.slane %v1934, 3
          %v1977 = vsel %vm1960, %v1976, %v1975
          %v1978 = vrot.slane %v1935, 2
          %v1979 = vsel %vm1963, %v1978, %v1977
          %1980 = vrot.lane.b32.xlu0 %v1979, 16
          %v1981 = vpop.permute.xlu0 %1980
          %v1983 = vrot.slane %v1928, 2
          %v1984 = vrot.slane %v1929, 1
          %v1985 = vsel %vm1945, %v1984, %v1983
          %v1986 = vsel %vm1948, %v1930, %v1985
          %v1987 = vrot.slane %v1931, 7
          %v1988 = vsel %vm1951, %v1987, %v1986
          %v1989 = vrot.slane %v1932, 6
          %v1990 = vsel %vm1954, %v1989, %v1988
          %v1991 = vrot.slane %v1933, 5
          %v1992 = vsel %vm1957, %v1991, %v1990
          %v1993 = vrot.slane %v1934, 4
          %v1994 = vsel %vm1960, %v1993, %v1992
          %v1995 = vrot.slane %v1935, 3
          %v1996 = vsel %vm1963, %v1995, %v1994
          %1997 = vrot.lane.b32.xlu0 %v1996, 32
          %v1998 = vpop.permute.xlu0 %1997
          %v2000 = vrot.slane %v1928, 3
          %v2001 = vrot.slane %v1929, 2
          %v2002 = vsel %vm1945, %v2001, %v2000
          %v2003 = vrot.slane %v1930, 1
          %v2004 = vsel %vm1948, %v2003, %v2002
          %v2005 = vsel %vm1951, %v1931, %v2004
          %v2006 = vrot.slane %v1932, 7
          %v2007 = vsel %vm1954, %v2006, %v2005
          %v2008 = vrot.slane %v1933, 6
          %v2009 = vsel %vm1957, %v2008, %v2007
          %v2010 = vrot.slane %v1934, 5
          %v2011 = vsel %vm1960, %v2010, %v2009
          %v2012 = vrot.slane %v1935, 4
          %v2013 = vsel %vm1963, %v2012, %v2011
          %2014 = vrot.lane.b32.xlu0 %v2013, 48
          %v2015 = vpop.permute.xlu0 %2014
          %v2017 = vrot.slane %v1928, 4
          %v2018 = vrot.slane %v1929, 3
          %v2019 = vsel %vm1945, %v2018, %v2017
          %v2020 = vrot.slane %v1930, 2
          %v2021 = vsel %vm1948, %v2020, %v2019
          %v2022 = vrot.slane %v1931, 1
          %v2023 = vsel %vm1951, %v2022, %v2021
          %v2024 = vsel %vm1954, %v1932, %v2023
          %v2025 = vrot.slane %v1933, 7
          %v2026 = vsel %vm1957, %v2025, %v2024
          %v2027 = vrot.slane %v1934, 6
          %v2028 = vsel %vm1960, %v2027, %v2026
          %v2029 = vrot.slane %v1935, 5
          %v2030 = vsel %vm1963, %v2029, %v2028
          %2031 = vrot.lane.b32.xlu0 %v2030, 64
          %v2032 = vpop.permute.xlu0 %2031
          %v2034 = vrot.slane %v1928, 5
          %v2035 = vrot.slane %v1929, 4
          %v2036 = vsel %vm1945, %v2035, %v2034
          %v2037 = vrot.slane %v1930, 3
          %v2038 = vsel %vm1948, %v2037, %v2036
          %v2039 = vrot.slane %v1931, 2
          %v2040 = vsel %vm1951, %v2039, %v2038
          %v2041 = vrot.slane %v1932, 1
          %v2042 = vsel %vm1954, %v2041, %v2040
          %v2043 = vsel %vm1957, %v1933, %v2042
          %v2044 = vrot.slane %v1934, 7
          %v2045 = vsel %vm1960, %v2044, %v2043
          %v2046 = vrot.slane %v1935, 6
          %v2047 = vsel %vm1963, %v2046, %v2045
          %2048 = vrot.lane.b32.xlu0 %v2047, 80
          %v2049 = vpop.permute.xlu0 %2048
          %v2051 = vrot.slane %v1928, 6
          %v2052 = vrot.slane %v1929, 5
          %v2053 = vsel %vm1945, %v2052, %v2051
          %v2054 = vrot.slane %v1930, 4
          %v2055 = vsel %vm1948, %v2054, %v2053
          %v2056 = vrot.slane %v1931, 3
          %v2057 = vsel %vm1951, %v2056, %v2055
          %v2058 = vrot.slane %v1932, 2
          %v2059 = vsel %vm1954, %v2058, %v2057
          %v2060 = vrot.slane %v1933, 1
          %v2061 = vsel %vm1957, %v2060, %v2059
          %v2062 = vsel %vm1960, %v1934, %v2061
          %v2063 = vrot.slane %v1935, 7
          %v2064 = vsel %vm1963, %v2063, %v2062
          %2065 = vrot.lane.b32.xlu0 %v2064, 96
          %v2066 = vpop.permute.xlu0 %2065
          %v2068 = vrot.slane %v1928, 7
          %v2069 = vrot.slane %v1929, 6
          %v2070 = vsel %vm1945, %v2069, %v2068
          %v2071 = vrot.slane %v1930, 5
          %v2072 = vsel %vm1948, %v2071, %v2070
          %v2073 = vrot.slane %v1931, 4
          %v2074 = vsel %vm1951, %v2073, %v2072
          %v2075 = vrot.slane %v1932, 3
          %v2076 = vsel %vm1954, %v2075, %v2074
          %v2077 = vrot.slane %v1933, 2
          %v2078 = vsel %vm1957, %v2077, %v2076
          %v2079 = vrot.slane %v1934, 1
          %v2080 = vsel %vm1960, %v2079, %v2078
          %v2081 = vsel %vm1963, %v1935, %v2080
          %2082 = vrot.lane.b32.xlu0 %v2081, 112
          %v2083 = vpop.permute.xlu0 %2082
          %vm2085 = vcmask 130048
          %v2086 = vsel %vm2085, %v1964, %v1981
          %vm2087 = vcmask 261120
          %v2088 = vsel %vm2087, %v2086, %v1998
          %vm2089 = vcmask 392192
          %v2090 = vsel %vm2089, %v2088, %v2015
          %vm2091 = vcmask 523264
          %v2092 = vsel %vm2091, %v2090, %v2032
          %vm2093 = vcmask 654336
          %v2094 = vsel %vm2093, %v2092, %v2049
          %vm2095 = vcmask 785408
          %v2096 = vsel %vm2095, %v2094, %v2066
          %vm2097 = vcmask 916480
          %v2098 = vsel %vm2097, %v2096, %v2083
          %v2099 = vpack.c.bf16 %v2098, %v2098
          %2100 = vst [vmem:[%s159] sm:$0xf] %v2099
          %s2101 = sadd.s32 64, %s1894
          %s2102 = scalar_lea.vmem [#allocation3], %s2101
          %v2103 = vld [vmem:[%s2102] sm:$0xff]
          %v2104 = vld [vmem:[%s2102 + $0x8] sm:$0xff]
          %v2105 = vld [vmem:[%s2102 + $0x10] sm:$0xff]
          %v2106 = vld [vmem:[%s2102 + $0x18] sm:$0xff]
          %v2107 = vld [vmem:[%s2102 + $0x20] sm:$0xff]
          %v2108 = vld [vmem:[%s2102 + $0x28] sm:$0xff]
          %v2109 = vld [vmem:[%s2102 + $0x30] sm:$0xff]
          %v2110 = vld [vmem:[%s2102 + $0x38] sm:$0xff]
          %v2111 = vsub.f32 %v2103, %v1907
          %v2112 = vsub.f32 %v2104, %v1907
          %v2113 = vsub.f32 %v2105, %v1907
          %v2114 = vsub.f32 %v2106, %v1907
          %v2115 = vsub.f32 %v2107, %v1907
          %v2116 = vsub.f32 %v2108, %v1907
          %v2117 = vsub.f32 %v2109, %v1907
          %v2118 = vsub.f32 %v2110, %v1907
          %v2119 = vmul.f32 %v2111, %v1919
          %v2120 = vmul.f32 %v2112, %v1919
          %v2121 = vmul.f32 %v2113, %v1919
          %v2122 = vmul.f32 %v2114, %v1919
          %v2123 = vmul.f32 %v2115, %v1919
          %v2124 = vmul.f32 %v2116, %v1919
          %v2125 = vmul.f32 %v2117, %v1919
          %v2126 = vmul.f32 %v2118, %v1919
          %v2127 = vmax.f32 %v2119, 0.0
          %v2128 = vmax.f32 %v2120, 0.0
          %v2129 = vmax.f32 %v2121, 0.0
          %v2130 = vmax.f32 %v2122, 0.0
          %v2131 = vmax.f32 %v2123, 0.0
          %v2132 = vmax.f32 %v2124, 0.0
          %v2133 = vmax.f32 %v2125, 0.0
          %v2134 = vmax.f32 %v2126, 0.0
          %v2143 = vrot.slane %v2128, 7
          %v2144 = vsel %vm1945, %v2143, %v2127
          %v2145 = vrot.slane %v2129, 6
          %v2146 = vsel %vm1948, %v2145, %v2144
          %v2147 = vrot.slane %v2130, 5
          %v2148 = vsel %vm1951, %v2147, %v2146
          %v2149 = vrot.slane %v2131, 4
          %v2150 = vsel %vm1954, %v2149, %v2148
          %v2151 = vrot.slane %v2132, 3
          %v2152 = vsel %vm1957, %v2151, %v2150
          %v2153 = vrot.slane %v2133, 2
          %v2154 = vsel %vm1960, %v2153, %v2152
          %v2155 = vrot.slane %v2134, 1
          %v2156 = vsel %vm1963, %v2155, %v2154
          %v2158 = vrot.slane %v2127, 1
          %v2159 = vsel %vm1945, %v2128, %v2158
          %v2160 = vrot.slane %v2129, 7
          %v2161 = vsel %vm1948, %v2160, %v2159
          %v2162 = vrot.slane %v2130, 6
          %v2163 = vsel %vm1951, %v2162, %v2161
          %v2164 = vrot.slane %v2131, 5
          %v2165 = vsel %vm1954, %v2164, %v2163
          %v2166 = vrot.slane %v2132, 4
          %v2167 = vsel %vm1957, %v2166, %v2165
          %v2168 = vrot.slane %v2133, 3
          %v2169 = vsel %vm1960, %v2168, %v2167
          %v2170 = vrot.slane %v2134, 2
          %v2171 = vsel %vm1963, %v2170, %v2169
          %2172 = vrot.lane.b32.xlu0 %v2171, 16
          %v2173 = vpop.permute.xlu0 %2172
          %v2175 = vrot.slane %v2127, 2
          %v2176 = vrot.slane %v2128, 1
          %v2177 = vsel %vm1945, %v2176, %v2175
          %v2178 = vsel %vm1948, %v2129, %v2177
          %v2179 = vrot.slane %v2130, 7
          %v2180 = vsel %vm1951, %v2179, %v2178
          %v2181 = vrot.slane %v2131, 6
          %v2182 = vsel %vm1954, %v2181, %v2180
          %v2183 = vrot.slane %v2132, 5
          %v2184 = vsel %vm1957, %v2183, %v2182
          %v2185 = vrot.slane %v2133, 4
          %v2186 = vsel %vm1960, %v2185, %v2184
          %v2187 = vrot.slane %v2134, 3
          %v2188 = vsel %vm1963, %v2187, %v2186
          %2189 = vrot.lane.b32.xlu0 %v2188, 32
          %v2190 = vpop.permute.xlu0 %2189
          %v2192 = vrot.slane %v2127, 3
          %v2193 = vrot.slane %v2128, 2
          %v2194 = vsel %vm1945, %v2193, %v2192
          %v2195 = vrot.slane %v2129, 1
          %v2196 = vsel %vm1948, %v2195, %v2194
          %v2197 = vsel %vm1951, %v2130, %v2196
          %v2198 = vrot.slane %v2131, 7
          %v2199 = vsel %vm1954, %v2198, %v2197
          %v2200 = vrot.slane %v2132, 6
          %v2201 = vsel %vm1957, %v2200, %v2199
          %v2202 = vrot.slane %v2133, 5
          %v2203 = vsel %vm1960, %v2202, %v2201
          %v2204 = vrot.slane %v2134, 4
          %v2205 = vsel %vm1963, %v2204, %v2203
          %2206 = vrot.lane.b32.xlu0 %v2205, 48
          %v2207 = vpop.permute.xlu0 %2206
          %v2209 = vrot.slane %v2127, 4
          %v2210 = vrot.slane %v2128, 3
          %v2211 = vsel %vm1945, %v2210, %v2209
          %v2212 = vrot.slane %v2129, 2
          %v2213 = vsel %vm1948, %v2212, %v2211
          %v2214 = vrot.slane %v2130, 1
          %v2215 = vsel %vm1951, %v2214, %v2213
          %v2216 = vsel %vm1954, %v2131, %v2215
          %v2217 = vrot.slane %v2132, 7
          %v2218 = vsel %vm1957, %v2217, %v2216
          %v2219 = vrot.slane %v2133, 6
          %v2220 = vsel %vm1960, %v2219, %v2218
          %v2221 = vrot.slane %v2134, 5
          %v2222 = vsel %vm1963, %v2221, %v2220
          %2223 = vrot.lane.b32.xlu0 %v2222, 64
          %v2224 = vpop.permute.xlu0 %2223
          %v2226 = vrot.slane %v2127, 5
          %v2227 = vrot.slane %v2128, 4
          %v2228 = vsel %vm1945, %v2227, %v2226
          %v2229 = vrot.slane %v2129, 3
          %v2230 = vsel %vm1948, %v2229, %v2228
          %v2231 = vrot.slane %v2130, 2
          %v2232 = vsel %vm1951, %v2231, %v2230
          %v2233 = vrot.slane %v2131, 1
          %v2234 = vsel %vm1954, %v2233, %v2232
          %v2235 = vsel %vm1957, %v2132, %v2234
          %v2236 = vrot.slane %v2133, 7
          %v2237 = vsel %vm1960, %v2236, %v2235
          %v2238 = vrot.slane %v2134, 6
          %v2239 = vsel %vm1963, %v2238, %v2237
          %2240 = vrot.lane.b32.xlu0 %v2239, 80
          %v2241 = vpop.permute.xlu0 %2240
          %v2243 = vrot.slane %v2127, 6
          %v2244 = vrot.slane %v2128, 5
          %v2245 = vsel %vm1945, %v2244, %v2243
          %v2246 = vrot.slane %v2129, 4
          %v2247 = vsel %vm1948, %v2246, %v2245
          %v2248 = vrot.slane %v2130, 3
          %v2249 = vsel %vm1951, %v2248, %v2247
          %v2250 = vrot.slane %v2131, 2
          %v2251 = vsel %vm1954, %v2250, %v2249
          %v2252 = vrot.slane %v2132, 1
          %v2253 = vsel %vm1957, %v2252, %v2251
          %v2254 = vsel %vm1960, %v2133, %v2253
          %v2255 = vrot.slane %v2134, 7
          %v2256 = vsel %vm1963, %v2255, %v2254
          %2257 = vrot.lane.b32.xlu0 %v2256, 96
          %v2258 = vpop.permute.xlu0 %2257
          %v2260 = vrot.slane %v2127, 7
          %v2261 = vrot.slane %v2128, 6
          %v2262 = vsel %vm1945, %v2261, %v2260
          %v2263 = vrot.slane %v2129, 5
          %v2264 = vsel %vm1948, %v2263, %v2262
          %v2265 = vrot.slane %v2130, 4
          %v2266 = vsel %vm1951, %v2265, %v2264
          %v2267 = vrot.slane %v2131, 3
          %v2268 = vsel %vm1954, %v2267, %v2266
          %v2269 = vrot.slane %v2132, 2
          %v2270 = vsel %vm1957, %v2269, %v2268
          %v2271 = vrot.slane %v2133, 1
          %v2272 = vsel %vm1960, %v2271, %v2270
          %v2273 = vsel %vm1963, %v2134, %v2272
          %2274 = vrot.lane.b32.xlu0 %v2273, 112
          %v2275 = vpop.permute.xlu0 %2274
          %v2277 = vsel %vm2085, %v2156, %v2173
          %v2278 = vsel %vm2087, %v2277, %v2190
          %v2279 = vsel %vm2089, %v2278, %v2207
          %v2280 = vsel %vm2091, %v2279, %v2224
          %v2281 = vsel %vm2093, %v2280, %v2241
          %v2282 = vsel %vm2095, %v2281, %v2258
          %v2283 = vsel %vm2097, %v2282, %v2275
          %v2284 = vpack.c.bf16 %v2283, %v2283
          %s2285 = scalar_lea.vmem %s159, 4 [#allocation4]
          %2286 = vst [vmem:[%s2285] sm:$0xf] %v2284
          %s2287 = sadd.s32 128, %s1894
          %s2288 = scalar_lea.vmem [#allocation3], %s2287
          %v2289 = vld [vmem:[%s2288] sm:$0xff]
          %v2290 = vld [vmem:[%s2288 + $0x8] sm:$0xff]
          %v2291 = vld [vmem:[%s2288 + $0x10] sm:$0xff]
          %v2292 = vld [vmem:[%s2288 + $0x18] sm:$0xff]
          %v2293 = vld [vmem:[%s2288 + $0x20] sm:$0xff]
          %v2294 = vld [vmem:[%s2288 + $0x28] sm:$0xff]
          %v2295 = vld [vmem:[%s2288 + $0x30] sm:$0xff]
          %v2296 = vld [vmem:[%s2288 + $0x38] sm:$0xff]
          %v2297 = vsub.f32 %v2289, %v1907
          %v2298 = vsub.f32 %v2290, %v1907
          %v2299 = vsub.f32 %v2291, %v1907
          %v2300 = vsub.f32 %v2292, %v1907
          %v2301 = vsub.f32 %v2293, %v1907
          %v2302 = vsub.f32 %v2294, %v1907
          %v2303 = vsub.f32 %v2295, %v1907
          %v2304 = vsub.f32 %v2296, %v1907
          %v2305 = vmul.f32 %v2297, %v1919
          %v2306 = vmul.f32 %v2298, %v1919
          %v2307 = vmul.f32 %v2299, %v1919
          %v2308 = vmul.f32 %v2300, %v1919
          %v2309 = vmul.f32 %v2301, %v1919
          %v2310 = vmul.f32 %v2302, %v1919
          %v2311 = vmul.f32 %v2303, %v1919
          %v2312 = vmul.f32 %v2304, %v1919
          %v2313 = vmax.f32 %v2305, 0.0
          %v2314 = vmax.f32 %v2306, 0.0
          %v2315 = vmax.f32 %v2307, 0.0
          %v2316 = vmax.f32 %v2308, 0.0
          %v2317 = vmax.f32 %v2309, 0.0
          %v2318 = vmax.f32 %v2310, 0.0
          %v2319 = vmax.f32 %v2311, 0.0
          %v2320 = vmax.f32 %v2312, 0.0
          %v2329 = vrot.slane %v2314, 7
          %v2330 = vsel %vm1945, %v2329, %v2313
          %v2331 = vrot.slane %v2315, 6
          %v2332 = vsel %vm1948, %v2331, %v2330
          %v2333 = vrot.slane %v2316, 5
          %v2334 = vsel %vm1951, %v2333, %v2332
          %v2335 = vrot.slane %v2317, 4
          %v2336 = vsel %vm1954, %v2335, %v2334
          %v2337 = vrot.slane %v2318, 3
          %v2338 = vsel %vm1957, %v2337, %v2336
          %v2339 = vrot.slane %v2319, 2
          %v2340 = vsel %vm1960, %v2339, %v2338
          %v2341 = vrot.slane %v2320, 1
          %v2342 = vsel %vm1963, %v2341, %v2340
          %v2344 = vrot.slane %v2313, 1
          %v2345 = vsel %vm1945, %v2314, %v2344
          %v2346 = vrot.slane %v2315, 7
          %v2347 = vsel %vm1948, %v2346, %v2345
          %v2348 = vrot.slane %v2316, 6
          %v2349 = vsel %vm1951, %v2348, %v2347
          %v2350 = vrot.slane %v2317, 5
          %v2351 = vsel %vm1954, %v2350, %v2349
          %v2352 = vrot.slane %v2318, 4
          %v2353 = vsel %vm1957, %v2352, %v2351
          %v2354 = vrot.slane %v2319, 3
          %v2355 = vsel %vm1960, %v2354, %v2353
          %v2356 = vrot.slane %v2320, 2
          %v2357 = vsel %vm1963, %v2356, %v2355
          %2358 = vrot.lane.b32.xlu0 %v2357, 16
          %v2359 = vpop.permute.xlu0 %2358
          %v2361 = vrot.slane %v2313, 2
          %v2362 = vrot.slane %v2314, 1
          %v2363 = vsel %vm1945, %v2362, %v2361
          %v2364 = vsel %vm1948, %v2315, %v2363
          %v2365 = vrot.slane %v2316, 7
          %v2366 = vsel %vm1951, %v2365, %v2364
          %v2367 = vrot.slane %v2317, 6
          %v2368 = vsel %vm1954, %v2367, %v2366
          %v2369 = vrot.slane %v2318, 5
          %v2370 = vsel %vm1957, %v2369, %v2368
          %v2371 = vrot.slane %v2319, 4
          %v2372 = vsel %vm1960, %v2371, %v2370
          %v2373 = vrot.slane %v2320, 3
          %v2374 = vsel %vm1963, %v2373, %v2372
          %2375 = vrot.lane.b32.xlu0 %v2374, 32
          %v2376 = vpop.permute.xlu0 %2375
          %v2378 = vrot.slane %v2313, 3
          %v2379 = vrot.slane %v2314, 2
          %v2380 = vsel %vm1945, %v2379, %v2378
          %v2381 = vrot.slane %v2315, 1
          %v2382 = vsel %vm1948, %v2381, %v2380
          %v2383 = vsel %vm1951, %v2316, %v2382
          %v2384 = vrot.slane %v2317, 7
          %v2385 = vsel %vm1954, %v2384, %v2383
          %v2386 = vrot.slane %v2318, 6
          %v2387 = vsel %vm1957, %v2386, %v2385
          %v2388 = vrot.slane %v2319, 5
          %v2389 = vsel %vm1960, %v2388, %v2387
          %v2390 = vrot.slane %v2320, 4
          %v2391 = vsel %vm1963, %v2390, %v2389
          %2392 = vrot.lane.b32.xlu0 %v2391, 48
          %v2393 = vpop.permute.xlu0 %2392
          %v2395 = vrot.slane %v2313, 4
          %v2396 = vrot.slane %v2314, 3
          %v2397 = vsel %vm1945, %v2396, %v2395
          %v2398 = vrot.slane %v2315, 2
          %v2399 = vsel %vm1948, %v2398, %v2397
          %v2400 = vrot.slane %v2316, 1
          %v2401 = vsel %vm1951, %v2400, %v2399
          %v2402 = vsel %vm1954, %v2317, %v2401
          %v2403 = vrot.slane %v2318, 7
          %v2404 = vsel %vm1957, %v2403, %v2402
          %v2405 = vrot.slane %v2319, 6
          %v2406 = vsel %vm1960, %v2405, %v2404
          %v2407 = vrot.slane %v2320, 5
          %v2408 = vsel %vm1963, %v2407, %v2406
          %2409 = vrot.lane.b32.xlu0 %v2408, 64
          %v2410 = vpop.permute.xlu0 %2409
          %v2412 = vrot.slane %v2313, 5
          %v2413 = vrot.slane %v2314, 4
          %v2414 = vsel %vm1945, %v2413, %v2412
          %v2415 = vrot.slane %v2315, 3
          %v2416 = vsel %vm1948, %v2415, %v2414
          %v2417 = vrot.slane %v2316, 2
          %v2418 = vsel %vm1951, %v2417, %v2416
          %v2419 = vrot.slane %v2317, 1
          %v2420 = vsel %vm1954, %v2419, %v2418
          %v2421 = vsel %vm1957, %v2318, %v2420
          %v2422 = vrot.slane %v2319, 7
          %v2423 = vsel %vm1960, %v2422, %v2421
          %v2424 = vrot.slane %v2320, 6
          %v2425 = vsel %vm1963, %v2424, %v2423
          %2426 = vrot.lane.b32.xlu0 %v2425, 80
          %v2427 = vpop.permute.xlu0 %2426
          %v2429 = vrot.slane %v2313, 6
          %v2430 = vrot.slane %v2314, 5
          %v2431 = vsel %vm1945, %v2430, %v2429
          %v2432 = vrot.slane %v2315, 4
          %v2433 = vsel %vm1948, %v2432, %v2431
          %v2434 = vrot.slane %v2316, 3
          %v2435 = vsel %vm1951, %v2434, %v2433
          %v2436 = vrot.slane %v2317, 2
          %v2437 = vsel %vm1954, %v2436, %v2435
          %v2438 = vrot.slane %v2318, 1
          %v2439 = vsel %vm1957, %v2438, %v2437
          %v2440 = vsel %vm1960, %v2319, %v2439
          %v2441 = vrot.slane %v2320, 7
          %v2442 = vsel %vm1963, %v2441, %v2440
          %2443 = vrot.lane.b32.xlu0 %v2442, 96
          %v2444 = vpop.permute.xlu0 %2443
          %v2446 = vrot.slane %v2313, 7
          %v2447 = vrot.slane %v2314, 6
          %v2448 = vsel %vm1945, %v2447, %v2446
          %v2449 = vrot.slane %v2315, 5
          %v2450 = vsel %vm1948, %v2449, %v2448
          %v2451 = vrot.slane %v2316, 4
          %v2452 = vsel %vm1951, %v2451, %v2450
          %v2453 = vrot.slane %v2317, 3
          %v2454 = vsel %vm1954, %v2453, %v2452
          %v2455 = vrot.slane %v2318, 2
          %v2456 = vsel %vm1957, %v2455, %v2454
          %v2457 = vrot.slane %v2319, 1
          %v2458 = vsel %vm1960, %v2457, %v2456
          %v2459 = vsel %vm1963, %v2320, %v2458
          %2460 = vrot.lane.b32.xlu0 %v2459, 112
          %v2461 = vpop.permute.xlu0 %2460
          %v2463 = vsel %vm2085, %v2342, %v2359
          %v2464 = vsel %vm2087, %v2463, %v2376
          %v2465 = vsel %vm2089, %v2464, %v2393
          %v2466 = vsel %vm2091, %v2465, %v2410
          %v2467 = vsel %vm2093, %v2466, %v2427
          %v2468 = vsel %vm2095, %v2467, %v2444
          %v2469 = vsel %vm2097, %v2468, %v2461
          %v2470 = vpack.c.bf16 %v2469, %v2469
          %s2471 = scalar_lea.vmem %s159, 8 [#allocation4]
          %2472 = vst [vmem:[%s2471] sm:$0xf] %v2470
          %s2473 = sadd.s32 192, %s1894
          %s2474 = scalar_lea.vmem [#allocation3], %s2473
          %v2475 = vld [vmem:[%s2474] sm:$0xff]
          %v2476 = vld [vmem:[%s2474 + $0x8] sm:$0xff]
          %v2477 = vld [vmem:[%s2474 + $0x10] sm:$0xff]
          %v2478 = vld [vmem:[%s2474 + $0x18] sm:$0xff]
          %v2479 = vld [vmem:[%s2474 + $0x20] sm:$0xff]
          %v2480 = vld [vmem:[%s2474 + $0x28] sm:$0xff]
          %v2481 = vld [vmem:[%s2474 + $0x30] sm:$0xff]
          %v2482 = vld [vmem:[%s2474 + $0x38] sm:$0xff]
          %v2483 = vsub.f32 %v2475, %v1907
          %v2484 = vsub.f32 %v2476, %v1907
          %v2485 = vsub.f32 %v2477, %v1907
          %v2486 = vsub.f32 %v2478, %v1907
          %v2487 = vsub.f32 %v2479, %v1907
          %v2488 = vsub.f32 %v2480, %v1907
          %v2489 = vsub.f32 %v2481, %v1907
          %v2490 = vsub.f32 %v2482, %v1907
          %v2491 = vmul.f32 %v2483, %v1919
          %v2492 = vmul.f32 %v2484, %v1919
          %v2493 = vmul.f32 %v2485, %v1919
          %v2494 = vmul.f32 %v2486, %v1919
          %v2495 = vmul.f32 %v2487, %v1919
          %v2496 = vmul.f32 %v2488, %v1919
          %v2497 = vmul.f32 %v2489, %v1919
          %v2498 = vmul.f32 %v2490, %v1919
          %v2499 = vmax.f32 %v2491, 0.0
          %v2500 = vmax.f32 %v2492, 0.0
          %v2501 = vmax.f32 %v2493, 0.0
          %v2502 = vmax.f32 %v2494, 0.0
          %v2503 = vmax.f32 %v2495, 0.0
          %v2504 = vmax.f32 %v2496, 0.0
          %v2505 = vmax.f32 %v2497, 0.0
          %v2506 = vmax.f32 %v2498, 0.0
          %v2515 = vrot.slane %v2500, 7
          %v2516 = vsel %vm1945, %v2515, %v2499
          %v2517 = vrot.slane %v2501, 6
          %v2518 = vsel %vm1948, %v2517, %v2516
          %v2519 = vrot.slane %v2502, 5
          %v2520 = vsel %vm1951, %v2519, %v2518
          %v2521 = vrot.slane %v2503, 4
          %v2522 = vsel %vm1954, %v2521, %v2520
          %v2523 = vrot.slane %v2504, 3
          %v2524 = vsel %vm1957, %v2523, %v2522
          %v2525 = vrot.slane %v2505, 2
          %v2526 = vsel %vm1960, %v2525, %v2524
          %v2527 = vrot.slane %v2506, 1
          %v2528 = vsel %vm1963, %v2527, %v2526
          %v2530 = vrot.slane %v2499, 1
          %v2531 = vsel %vm1945, %v2500, %v2530
          %v2532 = vrot.slane %v2501, 7
          %v2533 = vsel %vm1948, %v2532, %v2531
          %v2534 = vrot.slane %v2502, 6
          %v2535 = vsel %vm1951, %v2534, %v2533
          %v2536 = vrot.slane %v2503, 5
          %v2537 = vsel %vm1954, %v2536, %v2535
          %v2538 = vrot.slane %v2504, 4
          %v2539 = vsel %vm1957, %v2538, %v2537
          %v2540 = vrot.slane %v2505, 3
          %v2541 = vsel %vm1960, %v2540, %v2539
          %v2542 = vrot.slane %v2506, 2
          %v2543 = vsel %vm1963, %v2542, %v2541
          %2544 = vrot.lane.b32.xlu0 %v2543, 16
          %v2545 = vpop.permute.xlu0 %2544
          %v2547 = vrot.slane %v2499, 2
          %v2548 = vrot.slane %v2500, 1
          %v2549 = vsel %vm1945, %v2548, %v2547
          %v2550 = vsel %vm1948, %v2501, %v2549
          %v2551 = vrot.slane %v2502, 7
          %v2552 = vsel %vm1951, %v2551, %v2550
          %v2553 = vrot.slane %v2503, 6
          %v2554 = vsel %vm1954, %v2553, %v2552
          %v2555 = vrot.slane %v2504, 5
          %v2556 = vsel %vm1957, %v2555, %v2554
          %v2557 = vrot.slane %v2505, 4
          %v2558 = vsel %vm1960, %v2557, %v2556
          %v2559 = vrot.slane %v2506, 3
          %v2560 = vsel %vm1963, %v2559, %v2558
          %2561 = vrot.lane.b32.xlu0 %v2560, 32
          %v2562 = vpop.permute.xlu0 %2561
          %v2564 = vrot.slane %v2499, 3
          %v2565 = vrot.slane %v2500, 2
          %v2566 = vsel %vm1945, %v2565, %v2564
          %v2567 = vrot.slane %v2501, 1
          %v2568 = vsel %vm1948, %v2567, %v2566
          %v2569 = vsel %vm1951, %v2502, %v2568
          %v2570 = vrot.slane %v2503, 7
          %v2571 = vsel %vm1954, %v2570, %v2569
          %v2572 = vrot.slane %v2504, 6
          %v2573 = vsel %vm1957, %v2572, %v2571
          %v2574 = vrot.slane %v2505, 5
          %v2575 = vsel %vm1960, %v2574, %v2573
          %v2576 = vrot.slane %v2506, 4
          %v2577 = vsel %vm1963, %v2576, %v2575
          %2578 = vrot.lane.b32.xlu0 %v2577, 48
          %v2579 = vpop.permute.xlu0 %2578
          %v2581 = vrot.slane %v2499, 4
          %v2582 = vrot.slane %v2500, 3
          %v2583 = vsel %vm1945, %v2582, %v2581
          %v2584 = vrot.slane %v2501, 2
          %v2585 = vsel %vm1948, %v2584, %v2583
          %v2586 = vrot.slane %v2502, 1
          %v2587 = vsel %vm1951, %v2586, %v2585
          %v2588 = vsel %vm1954, %v2503, %v2587
          %v2589 = vrot.slane %v2504, 7
          %v2590 = vsel %vm1957, %v2589, %v2588
          %v2591 = vrot.slane %v2505, 6
          %v2592 = vsel %vm1960, %v2591, %v2590
          %v2593 = vrot.slane %v2506, 5
          %v2594 = vsel %vm1963, %v2593, %v2592
          %2595 = vrot.lane.b32.xlu0 %v2594, 64
          %v2596 = vpop.permute.xlu0 %2595
          %v2598 = vrot.slane %v2499, 5
          %v2599 = vrot.slane %v2500, 4
          %v2600 = vsel %vm1945, %v2599, %v2598
          %v2601 = vrot.slane %v2501, 3
          %v2602 = vsel %vm1948, %v2601, %v2600
          %v2603 = vrot.slane %v2502, 2
          %v2604 = vsel %vm1951, %v2603, %v2602
          %v2605 = vrot.slane %v2503, 1
          %v2606 = vsel %vm1954, %v2605, %v2604
          %v2607 = vsel %vm1957, %v2504, %v2606
          %v2608 = vrot.slane %v2505, 7
          %v2609 = vsel %vm1960, %v2608, %v2607
          %v2610 = vrot.slane %v2506, 6
          %v2611 = vsel %vm1963, %v2610, %v2609
          %2612 = vrot.lane.b32.xlu0 %v2611, 80
          %v2613 = vpop.permute.xlu0 %2612
          %v2615 = vrot.slane %v2499, 6
          %v2616 = vrot.slane %v2500, 5
          %v2617 = vsel %vm1945, %v2616, %v2615
          %v2618 = vrot.slane %v2501, 4
          %v2619 = vsel %vm1948, %v2618, %v2617
          %v2620 = vrot.slane %v2502, 3
          %v2621 = vsel %vm1951, %v2620, %v2619
          %v2622 = vrot.slane %v2503, 2
          %v2623 = vsel %vm1954, %v2622, %v2621
          %v2624 = vrot.slane %v2504, 1
          %v2625 = vsel %vm1957, %v2624, %v2623
          %v2626 = vsel %vm1960, %v2505, %v2625
          %v2627 = vrot.slane %v2506, 7
          %v2628 = vsel %vm1963, %v2627, %v2626
          %2629 = vrot.lane.b32.xlu0 %v2628, 96
          %v2630 = vpop.permute.xlu0 %2629
          %v2632 = vrot.slane %v2499, 7
          %v2633 = vrot.slane %v2500, 6
          %v2634 = vsel %vm1945, %v2633, %v2632
          %v2635 = vrot.slane %v2501, 5
          %v2636 = vsel %vm1948, %v2635, %v2634
          %v2637 = vrot.slane %v2502, 4
          %v2638 = vsel %vm1951, %v2637, %v2636
          %v2639 = vrot.slane %v2503, 3
          %v2640 = vsel %vm1954, %v2639, %v2638
          %v2641 = vrot.slane %v2504, 2
          %v2642 = vsel %vm1957, %v2641, %v2640
          %v2643 = vrot.slane %v2505, 1
          %v2644 = vsel %vm1960, %v2643, %v2642
          %v2645 = vsel %vm1963, %v2506, %v2644
          %2646 = vrot.lane.b32.xlu0 %v2645, 112
          %v2647 = vpop.permute.xlu0 %2646
          %v2649 = vsel %vm2085, %v2528, %v2545
          %v2650 = vsel %vm2087, %v2649, %v2562
          %v2651 = vsel %vm2089, %v2650, %v2579
          %v2652 = vsel %vm2091, %v2651, %v2596
          %v2653 = vsel %vm2093, %v2652, %v2613
          %v2654 = vsel %vm2095, %v2653, %v2630
          %v2655 = vsel %vm2097, %v2654, %v2647
          %v2656 = vpack.c.bf16 %v2655, %v2655
          %s2657 = scalar_lea.vmem %s159, 12 [#allocation4]
          %2658 = vst [vmem:[%s2657] sm:$0xf] %v2656
        $region40: #{tpu_custom_call.1} parent=27 // pred_fallthru
          _
        %s2659 = sand.u32 %s94, 1
        %s2660 = scalar_lea.sflag [#allocation5], %s2659
        %s2661 = sand.u32 %s94, 1
        %s2662 = smul.addr %s2661, 16
        %s2663 = scalar_lea.vmem [#allocation4], %s2662
        // Predicated region
        $region41: #{tpu_custom_call.1} parent=27 // pred_check
          %p2664 = pneg %p104
        $region42: #{tpu_custom_call.1} parent=27 // pred_check_branch
          %2666 = sbr.rel (%p2664) target = $region44
        $region43: #{tpu_custom_call.1} parent=27 // pred_region
          %s2667 = smul.u32 %s22, %s23
          %s2669 = ssub.s32 256, 256
          %2670 = vsyncadd %s2660, %s2669
          %s2671 = smul.addr %s21, 4
          %s2672 = sadd.s32 %s2667, %s2671
          %s2673 = smul.addr %s2672, 64
          %s2674 = scalar_lea.hbm %s2, %s2673
          %s2675 = sshll.u32 %s2663, 4
          %s2676 = int_to_ptr.vmem [resolvable:$true] %s2675
          %2681 = dma.vmem_to_hbm [thread:$0]  %s2676, 256, %s2674, %s2660, 64, 64, 4
        $region44: #{tpu_custom_call.1} parent=27 // pred_fallthru
          _
      $region28: #{tpu_custom_call.1} parent=5 // pred_fallthru
        _
      %p2682 = scmp.le.s32.totalorder 2, %s11
      // Predicated region
      $region45: #{tpu_custom_call.1} parent=5 // pred_check
        %p2683 = pneg %p2682
      $region46: #{tpu_custom_call.1} parent=5 // pred_check_branch
        %2685 = sbr.rel (%p2683) target = $region48
      $region47: #{tpu_custom_call.1} parent=5 // pred_region
        %s2686 = ssub.s32 %s11, 2
        // Predicated region
        $region49: #{tpu_custom_call.1} parent=47 // pred_check
          %p2687 = pneg %p110
        $region50: #{tpu_custom_call.1} parent=47 // pred_check_branch
          %2689 = sbr.rel (%p2687) target = $region52
        $region51: #{tpu_custom_call.1} parent=47 // pred_region
          %s2690 = sand.u32 %s95, 1
          %s2691 = scalar_lea.sflag [#allocation5], %s2690
          %s2692 = sand.u32 %s95, 1
          %s2693 = smul.addr %s2692, 16
          %s2694 = scalar_lea.vmem [#allocation4], %s2693
          %2695 = dma.done %s2691, 256
        $region52: #{tpu_custom_call.1} parent=47 // pred_fallthru
          _
      $region48: #{tpu_custom_call.1} parent=5 // pred_fallthru
        _
    $region6: #{tpu_custom_call.1} parent=1 // loop_footer
      %s15 = sadd.s32 1, %s11
    $region7: #{tpu_custom_call.1} parent=1 // loop_footer_branch
      %10 = sbr.rel target = $region3
    $region8: #{tpu_custom_call.1} parent=1 // loop_exit
      _
    %2696 = vsyncpa [#allocation5], 1
    %s2697 = scalar_lea.sflag [#allocation5], 1
    %2698 = vsyncpa %s2697, 1

</llo_original>
